<compile_context>
chip_gen: v5e
topology: v5e:2x2
jax: 0.10.0
libtpu: 0.0.40
codegen_flags: <defaults>
</compile_context>

<pallas_src>
import math
import numpy as np
import jax
import jax.numpy as jnp
from jax.experimental import pallas as pl
from jax.experimental.pallas import tpu as pltpu

# ---------------- module hyper-parameters (FastAudio defaults) ----------------
SAMPLE_RATE = 16000
N_FFT = 400
WIN_LENGTH = 400              # 25 ms @ 16 kHz
HOP = 160                     # 10 ms @ 16 kHz
N_STFT = N_FFT // 2 + 1       # 201 one-sided bins
N_STFT_PAD = 256              # lane-padded freq bins
N_MELS = 40
N_MELS_PAD = 128              # lane-padded mel bins (lane-dense output slab)
N_DFT_K = 3 * HOP             # 480: DFT K padded so the 3 hop sub-matmuls align
OVERLAP_ROWS = 8              # >=2 extra hop rows per tile, padded to sublane mult
F_MIN, F_MAX = 0.0, SAMPLE_RATE / 2.0
AMIN = 1e-10
TOP_DB = 80.0
MULTIPLIER = 10.0             # power_spectrogram == 2
DB_SCALE = MULTIPLIER / math.log(10.0)   # 10*log10(x) == DB_SCALE * ln(x)


def _round_up(x, m):
    return ((x + m - 1) // m) * m


def _cdiv(a, b):
    return (a + b - 1) // b


def _to_mel(hz):
    return 2595.0 * math.log10(1.0 + hz / 700.0)


def build_constants():
    """Deterministic constant setup (plain numpy glue)."""
    n = np.arange(N_FFT, dtype=np.float64)
    # torch.hamming_window(400) default (periodic=True)
    window = 0.54 - 0.46 * np.cos(2.0 * np.pi * n / WIN_LENGTH)

    # One-sided real DFT with the Hamming window folded in (no per-frame
    # windowing multiply anywhere).  +sin is used for the imaginary part; only
    # valid because the result is squared into the power spectrum.
    k = np.arange(N_STFT, dtype=np.float64)
    ang = 2.0 * np.pi * np.outer(n, k) / N_FFT            # [n_fft, n_stft]
    cos_w = window[:, None] * np.cos(ang)
    sin_w = window[:, None] * np.sin(ang)

    # [N_DFT_K, 2*N_STFT_PAD] weight: rows 0:400 are the windowed DFT (rows
    # 400:480 zero so the third 160-sample hop sub-matmul ignores its last 80
    # samples); lanes [0:201]=re, [256:457]=im, other lanes zero (zero power).
    dft = np.zeros((N_DFT_K, 2 * N_STFT_PAD), dtype=np.float64)
    dft[:N_FFT, :N_STFT] = cos_w
    dft[:N_FFT, N_STFT_PAD:N_STFT_PAD + N_STFT] = sin_w

    # Triangular Mel filterbank (Filterbank, freeze=True path), zero-padded to
    # [256, 128] so the mel matmul K dim and the output lane dim are vreg-dense.
    mel_pts = np.linspace(_to_mel(F_MIN), _to_mel(F_MAX), N_MELS + 2)
    hz = 700.0 * (10.0 ** (mel_pts / 2595.0) - 1.0)
    band = (hz[1:] - hz[:-1])[:-1] / SAMPLE_RATE           # [n_mels]
    f_central = hz[1:-1] / SAMPLE_RATE                     # [n_mels]
    # forward() clamps then re-scales by sample_rate
    f_central = np.clip(f_central, 0.0, 0.5) * SAMPLE_RATE
    band = np.clip(band, 3.1 / 16000.0, 603.7 / 16000.0) * SAMPLE_RATE
    all_freqs = np.linspace(0.0, SAMPLE_RATE // 2, N_STFT)  # [n_stft]
    slope = (all_freqs[None, :] - f_central[:, None]) / band[:, None]
    fbank = np.maximum(0.0, np.minimum(slope + 1.0, -slope + 1.0)).T  # [201, 40]
    fbank_pad = np.zeros((N_STFT_PAD, N_MELS_PAD), dtype=np.float64)
    fbank_pad[:N_STFT, :N_MELS] = fbank

    return (jnp.asarray(dft, jnp.float32),
            jnp.asarray(fbank_pad, jnp.float32))


# ------------------------------- Pallas kernel --------------------------------
def fastaudio_kernel(slab_ref, dft_ref, fbank_ref, out_ref):
    # slab_ref : (1, TM+8, 160)  hop-major waveform slab (bf16 or f32)
    # dft_ref  : (480, 512)      window-folded DFT weight (K zero-padded)
    # fbank_ref: (256, 128)      mel filterbank
    # out_ref  : (TM, 128)       log-mel dB (f32)
    tm = out_ref.shape[0]
    # Upcast the slab before the (sublane-unaligned) shifted slices; the cost
    # is a trivial VPU cast and it keeps the shifts in plain 32-bit layout.
    slab = slab_ref[0].astype(jnp.float32)                 # (TM+8, 160)
    dft = dft_ref[...]                                     # (480, 512)

    # Frame r covers hops r, r+1, r+2 -> three shifted K=160 sub-matmuls.
    y = None
    for s in range(3):
        lhs = slab[s:s + tm, :].astype(dft.dtype)          # (TM, 160)
        rhs = dft[s * HOP:(s + 1) * HOP, :]                # (160, 512)
        part = jnp.dot(lhs, rhs, preferred_element_type=jnp.float32)
        y = part if y is None else y + part                # (TM, 512) f32

    re = y[:, :N_STFT_PAD]
    im = y[:, N_STFT_PAD:]
    power = re * re + im * im            # spectral_magnitude (power=1 -> |X|^2)
    fb = jnp.dot(power.astype(fbank_ref.dtype), fbank_ref[...],
                 preferred_element_type=jnp.float32)       # (TM, 128)
    # Filterbank._amplitude_to_DB; db_multiplier term == 0; global top_db clamp
    # (full-tensor reduction) is applied outside the kernel.
    out_ref[...] = DB_SCALE * jnp.log(jnp.maximum(fb, AMIN))


# ------------------------------- wrapper / glue --------------------------------
def _choose_tm(n_frames, batch):
    """Frame rows per grid step: one full-width step per batch when the frames
    fit (no more tm=8 small-M degradation), capped at 512 rows; keep >= 2 total
    grid steps when there is enough work so both v7x TensorCores get fed."""
    tm = min(512, _round_up(n_frames, 8))
    if batch * _cdiv(n_frames, tm) < 2 and n_frames > 16:
        tm = _round_up(_cdiv(n_frames, 2), 8)
    return tm


def fastaudio_forward(wav, dft_mat, fbank_mat, *, use_bf16=True):
    """wav: [B, L] float32 -> log-mel fbanks [B, n_frames, n_mels] float32."""
    B, L = wav.shape
    n_frames = 1 + L // HOP
    tm = _choose_tm(n_frames, B)
    n_tiles = _cdiv(n_frames, tm)
    n_frames_pad = n_tiles * tm
    n_hops = n_frames_pad + OVERLAP_ROWS

    # torch.stft(center=True); speechbrain STFT default pad_mode="constant".
    pad_l = N_FFT // 2
    pad_r = n_hops * HOP - (L + pad_l)
    xp = jnp.pad(wav, ((0, 0), (pad_l, pad_r)))
    hops = xp.reshape(B, n_hops, HOP)                      # [B, n_hops, 160]

    # Overlapping per-tile hop slabs: tile j needs hop rows [j*tm, j*tm+tm+2),
    # padded to +8 rows.  Only ~8/tm of the waveform is duplicated (vs. 2.5x
    # for a [M, 400] frames matrix).
    row_idx = (jnp.arange(n_tiles)[:, None] * tm
               + jnp.arange(tm + OVERLAP_ROWS)[None, :])   # [n_tiles, tm+8]
    slabs = hops[:, row_idx, :].reshape(B * n_tiles, tm + OVERLAP_ROWS, HOP)

    in_dtype = jnp.bfloat16 if use_bf16 else jnp.float32
    slabs = slabs.astype(in_dtype)
    dft = dft_mat.astype(in_dtype)
    fbank = fbank_mat.astype(in_dtype)

    Mp = B * n_tiles * tm
    elem_bytes = 2 if use_bf16 else 4
    cost = pl.CostEstimate(
        flops=2 * Mp * N_DFT_K * (2 * N_STFT_PAD)
              + 2 * Mp * N_STFT_PAD * N_MELS_PAD
              + 3 * Mp * N_STFT_PAD,
        transcendentals=Mp * N_MELS_PAD,
        bytes_accessed=elem_bytes * (B * n_tiles * (tm + OVERLAP_ROWS) * HOP
                                     + N_DFT_K * 2 * N_STFT_PAD
                                     + N_STFT_PAD * N_MELS_PAD)
                       + 4 * Mp * N_MELS_PAD,
    )

    out = pl.pallas_call(
        fastaudio_kernel,
        out_shape=jax.ShapeDtypeStruct((Mp, N_MELS_PAD), jnp.float32),
        grid=(B * n_tiles,),
        in_specs=[
            pl.BlockSpec((1, tm + OVERLAP_ROWS, HOP), lambda i: (i, 0, 0)),
            pl.BlockSpec((N_DFT_K, 2 * N_STFT_PAD), lambda i: (0, 0)),
            pl.BlockSpec((N_STFT_PAD, N_MELS_PAD), lambda i: (0, 0)),
        ],
        out_specs=pl.BlockSpec((tm, N_MELS_PAD), lambda i: (i, 0)),
        compiler_params=pltpu.CompilerParams(
            dimension_semantics=("parallel",)),
        cost_estimate=cost,
    )(slabs, dft, fbank)

    x_db = out.reshape(B, n_frames_pad, N_MELS_PAD)[:, :n_frames, :N_MELS]
    # Global top_db clamp, matching the spec's x_db.max() over the whole tensor.
    x_db = jnp.maximum(x_db, jnp.max(x_db) - TOP_DB)
    return x_db


# ------------------------- plain-JAX reference (checks) ------------------------
def reference_forward(wav, dft_mat, fbank_mat, dtype=jnp.float32):
    """Plain-JAX reference.  dtype=bfloat16 mirrors the kernel's MXU input
    quantization (with f32 accumulation); dtype=float32 is the exact path."""
    B, L = wav.shape
    pad = N_FFT // 2
    xp = jnp.pad(wav, ((0, 0), (pad, pad)))
    n_frames = 1 + L // HOP
    idx = jnp.arange(n_frames)[:, None] * HOP + jnp.arange(N_FFT)[None, :]
    frames = xp[:, idx].reshape(B * n_frames, N_FFT)
    frames = frames.astype(dtype).astype(jnp.float32)
    dft = dft_mat[:N_FFT].astype(dtype).astype(jnp.float32)
    fb_m = fbank_mat.astype(dtype).astype(jnp.float32)
    y = frames @ dft
    re, im = y[:, :N_STFT_PAD], y[:, N_STFT_PAD:]
    power = (re * re + im * im).astype(dtype).astype(jnp.float32)
    mel = power @ fb_m
    x_db = DB_SCALE * jnp.log(jnp.maximum(mel, AMIN))
    x_db = x_db[:, :N_MELS].reshape(B, n_frames, N_MELS)
    return jnp.maximum(x_db, jnp.max(x_db) - TOP_DB)


if __name__ == "__main__":
    key = jax.random.PRNGKey(0)
    B, L = 2, 3200                                         # 2 waveforms, 0.2 s each
    wav = jax.random.normal(key, (B, L), dtype=jnp.float32)

    dft_mat, fbank_mat = build_constants()
    feats = jax.block_until_ready(fastaudio_forward(wav, dft_mat, fbank_mat))

    expected_frames = 1 + L // HOP
    assert feats.shape == (B, expected_frames, N_MELS), feats.shape
    assert feats.dtype == jnp.float32
    assert bool(jnp.all(jnp.isfinite(feats)))

    # bf16-consistent reference (same MXU input quantization, f32 accumulation).
    ref_bf16 = jax.block_until_ready(
        reference_forward(wav, dft_mat, fbank_mat, jnp.bfloat16))
    assert float(jnp.max(jnp.abs(feats - ref_bf16))) < 5e-2

    # Validate bf16 log-mel error against the full-f32 reference (review item).
    ref_f32 = jax.block_until_ready(
        reference_forward(wav, dft_mat, fbank_mat, jnp.float32))
    assert float(jnp.max(jnp.abs(feats - ref_f32))) < 5e-1

    print("KERNEL_OK")
</pallas_src>

<mosaic_0001>
module attributes {stable_mosaic.version = 11 : i64} {
  func.func @fastaudio_kernel(%arg0: i32, %arg1: memref<1x32x160xbf16, #tpu.memory_space<vmem>>, %arg2: memref<480x512xbf16, #tpu.memory_space<vmem>>, %arg3: memref<256x128xbf16, #tpu.memory_space<vmem>>, %arg4: memref<24x128xf32, #tpu.memory_space<vmem>>) attributes {dimension_semantics = [#tpu.dimension_semantics<parallel>], iteration_bounds = array<i64: 2>, scalar_prefetch = 0 : i64, scratch_operands = 0 : i64, tpu.core_type = #tpu.core_type<tc>, window_params = [{transform_indices = @transform_0, window_bounds = array<i64: 1, 32, 160>}, {pipeline_mode = #tpu.pipeline_mode<synchronous>, transform_indices = @transform_1, window_bounds = array<i64: 480, 512>}, {pipeline_mode = #tpu.pipeline_mode<synchronous>, transform_indices = @transform_2, window_bounds = array<i64: 256, 128>}, {transform_indices = @transform_3, window_bounds = array<i64: 24, 128>}]} {
    %c0 = arith.constant 0 : index
    %c0_0 = arith.constant 0 : index
    %c0_1 = arith.constant 0 : index
    %0 = vector.load %arg1[%c0, %c0_0, %c0_1] : memref<1x32x160xbf16, #tpu.memory_space<vmem>>, vector<1x32x160xbf16>
    %1 = vector.shape_cast %0 : vector<1x32x160xbf16> to vector<32x160xbf16>
    %2 = arith.extf %1 : vector<32x160xbf16> to vector<32x160xf32>
    %c0_2 = arith.constant 0 : index
    %c0_3 = arith.constant 0 : index
    %3 = vector.load %arg2[%c0_2, %c0_3] : memref<480x512xbf16, #tpu.memory_space<vmem>>, vector<480x512xbf16>
    %4 = vector.extract_strided_slice %2 {offsets = [0, 0], sizes = [24, 160], strides = [1, 1]} : vector<32x160xf32> to vector<24x160xf32>
    %5 = arith.truncf %4 : vector<24x160xf32> to vector<24x160xbf16>
    %6 = vector.extract_strided_slice %3 {offsets = [0, 0], sizes = [160, 512], strides = [1, 1]} : vector<480x512xbf16> to vector<160x512xbf16>
    %cst = arith.constant dense<0.000000e+00> : vector<24x512xf32>
    %7 = tpu.matmul %5, %6, %cst {dimension_numbers = #tpu.dot_dimension_numbers<[1], [0], [0], [1], [0, 0, 1, 1], [], []>} : vector<24x160xbf16>, vector<160x512xbf16>, vector<24x512xf32> -> vector<24x512xf32>
    %8 = vector.extract_strided_slice %2 {offsets = [1, 0], sizes = [24, 160], strides = [1, 1]} : vector<32x160xf32> to vector<24x160xf32>
    %9 = arith.truncf %8 : vector<24x160xf32> to vector<24x160xbf16>
    %10 = vector.extract_strided_slice %3 {offsets = [160, 0], sizes = [160, 512], strides = [1, 1]} : vector<480x512xbf16> to vector<160x512xbf16>
    %cst_4 = arith.constant dense<0.000000e+00> : vector<24x512xf32>
    %11 = tpu.matmul %9, %10, %cst_4 {dimension_numbers = #tpu.dot_dimension_numbers<[1], [0], [0], [1], [0, 0, 1, 1], [], []>} : vector<24x160xbf16>, vector<160x512xbf16>, vector<24x512xf32> -> vector<24x512xf32>
    %12 = arith.addf %7, %11 : vector<24x512xf32>
    %13 = vector.extract_strided_slice %2 {offsets = [2, 0], sizes = [24, 160], strides = [1, 1]} : vector<32x160xf32> to vector<24x160xf32>
    %14 = arith.truncf %13 : vector<24x160xf32> to vector<24x160xbf16>
    %15 = vector.extract_strided_slice %3 {offsets = [320, 0], sizes = [160, 512], strides = [1, 1]} : vector<480x512xbf16> to vector<160x512xbf16>
    %cst_5 = arith.constant dense<0.000000e+00> : vector<24x512xf32>
    %16 = tpu.matmul %14, %15, %cst_5 {dimension_numbers = #tpu.dot_dimension_numbers<[1], [0], [0], [1], [0, 0, 1, 1], [], []>} : vector<24x160xbf16>, vector<160x512xbf16>, vector<24x512xf32> -> vector<24x512xf32>
    %17 = arith.addf %12, %16 : vector<24x512xf32>
    %18 = vector.extract_strided_slice %17 {offsets = [0, 0], sizes = [24, 256], strides = [1, 1]} : vector<24x512xf32> to vector<24x256xf32>
    %19 = vector.extract_strided_slice %17 {offsets = [0, 256], sizes = [24, 256], strides = [1, 1]} : vector<24x512xf32> to vector<24x256xf32>
    %20 = arith.mulf %18, %18 : vector<24x256xf32>
    %21 = arith.mulf %19, %19 : vector<24x256xf32>
    %22 = arith.addf %20, %21 : vector<24x256xf32>
    %23 = arith.truncf %22 : vector<24x256xf32> to vector<24x256xbf16>
    %c0_6 = arith.constant 0 : index
    %c0_7 = arith.constant 0 : index
    %24 = vector.load %arg3[%c0_6, %c0_7] : memref<256x128xbf16, #tpu.memory_space<vmem>>, vector<256x128xbf16>
    %cst_8 = arith.constant dense<0.000000e+00> : vector<24x128xf32>
    %25 = tpu.matmul %23, %24, %cst_8 {dimension_numbers = #tpu.dot_dimension_numbers<[1], [0], [0], [1], [0, 0, 1, 1], [], []>} : vector<24x256xbf16>, vector<256x128xbf16>, vector<24x128xf32> -> vector<24x128xf32>
    %cst_9 = arith.constant 1.000000e-10 : f32
    %26 = vector.broadcast %cst_9 : f32 to vector<24x128xf32>
    %27 = arith.maximumf %25, %26 : vector<24x128xf32>
    %28 = math.log %27 : vector<24x128xf32>
    %cst_10 = arith.constant 4.34294462 : f32
    %29 = vector.broadcast %cst_10 : f32 to vector<24x128xf32>
    %30 = arith.mulf %29, %28 : vector<24x128xf32>
    %c0_11 = arith.constant 0 : index
    %c0_12 = arith.constant 0 : index
    %31 = vector.load %arg4[%c0_11, %c0_12] : memref<24x128xf32, #tpu.memory_space<vmem>>, vector<24x128xf32>
    tpu.vector_store %arg4[%c0_11, %c0_12], %30 {strides = array<i32>} : memref<24x128xf32, #tpu.memory_space<vmem>>, vector<24x128xf32>,
    return
  }
  func.func @transform_0(%arg0: i32) -> (i32, i32, i32) {
    %c0_i32 = arith.constant 0 : i32
    %c0_i32_0 = arith.constant 0 : i32
    %c0_i32_1 = arith.constant 0 : i32
    return %arg0, %c0_i32, %c0_i32_0 : i32, i32, i32
  }
  func.func @transform_1(%arg0: i32) -> (i32, i32) {
    %c0_i32 = arith.constant 0 : i32
    %c0_i32_0 = arith.constant 0 : i32
    %c0_i32_1 = arith.constant 0 : i32
    return %c0_i32, %c0_i32_0 : i32, i32
  }
  func.func @transform_2(%arg0: i32) -> (i32, i32) {
    %c0_i32 = arith.constant 0 : i32
    %c0_i32_0 = arith.constant 0 : i32
    %c0_i32_1 = arith.constant 0 : i32
    return %c0_i32, %c0_i32_0 : i32, i32
  }
  func.func @transform_3(%arg0: i32) -> (i32, i32) {
    %c0_i32 = arith.constant 0 : i32
    %c0_i32_0 = arith.constant 0 : i32
    return %arg0, %c0_i32 : i32, i32
  }
}

</mosaic_0001>

<llo_original>
// kernel: tpu_custom_call.1
$region0: #{tpu_custom_call.1}
  #allocation0 [shape = 'u32[]', space=smem, size = 0x4, offset = 0x4, fixed_abs, tag = 'smem constant byte address 0x4 - core index']
  #allocation1 [shape = 'u32[72,128]{1,0:T(1,128)}', space=vmem, size = 0x9000, scoped, tag = 'internal scratch']
  %s0 = inlined_call_operand.hbm [shape: bf16[2,32,160], index: 0, kind: input, shape index: {}]
  %s1 = inlined_call_operand.hbm [shape: bf16[480,512], index: 1, kind: input, shape index: {}]
  %s2 = inlined_call_operand.hbm [shape: bf16[256,128], index: 2, kind: input, shape index: {}]
  %s3 = inlined_call_operand.hbm [shape: f32[48,128], index: 3, kind: output, shape index: {}]
  %s4 = sld [smem:[#allocation0]]
  $region57: #{tpu_custom_call.1} parent=0
    _
  %s6 = ssub.s32 1, %s4
  %s7 = scalar_select 0, %s6, %s4
  $region1: #{tpu_custom_call.1} parent=0
    #allocation2 [shape = 'u8[32768]{0}', space=vmem, size = 0x8000, scoped, tag = 'input window, operand 0']
    #allocation3 [shape = 's32[2]{0}', space=sflag, size = 0x8, scoped, tag = 'scoped memory for tpu_custom_call.1']
    #allocation4 [shape = 's32[2]{0}', space=sflag, size = 0x8, scoped, tag = 'scoped memory for tpu_custom_call.1']
    #allocation5 [shape = 'u8[491520]{0}', space=vmem, size = 0x78000, scoped, tag = 'input window, operand 1, single buffered']
    #allocation6 [shape = 's32[1]{0}', space=sflag, size = 0x4, scoped, tag = 'scoped memory for tpu_custom_call.1']
    #allocation7 [shape = 'u8[65536]{0}', space=vmem, size = 0x10000, scoped, tag = 'input window, operand 2, single buffered']
    #allocation8 [shape = 'u8[24576]{0}', space=vmem, size = 0x6000, scoped, tag = 'output window, operand 0']
    %8 = vsyncpa [#allocation3], 0
    %s9 = scalar_lea.sflag [#allocation3], 1
    %10 = vsyncpa %s9, 0
    %11 = vsyncpa [#allocation6], 0
    %12 = vsyncpa [#allocation4], 0
    %s13 = scalar_lea.sflag [#allocation4], 1
    %14 = vsyncpa %s13, 0
    loop: start=0, step=1, limit=4
    $region2: #{tpu_custom_call.1} parent=1 // loop_pre_header
      _
    $region3: #{tpu_custom_call.1} parent=1 // loop_header
      %s16 = sphi 0, %s20
      %p17 = scmp.ge.s32.totalorder %s16, 4
      %s26 = sphi 0, %s28
      %s29 = sphi 0, %s26
      %s30 = sphi 0, %s29
      %s46 = sphi 0, %s30
      %s50 = sphi 0, %s50
      %s52 = sphi 0, %s50
      %s53 = sphi 0, %s52
      %s67 = sphi 0, %s53
      %s71 = sphi 0, %s71
      %s73 = sphi 0, %s71
      %s74 = sphi 0, %s73
      %s88 = sphi 0, %s74
      %s94 = sphi 0, %s96
      %s97 = sphi 0, %s94
      %s98 = sphi 0, %s97
      %s114 = sphi 0, %s98
    $region4: #{tpu_custom_call.1} parent=1 // loop_header_branch
      %19 = sbr.rel (%p17) target = $region8
    $region5: #{tpu_custom_call.1} parent=1 // loop_body
      %s21 = ssub.s32 %s16, 1
      %s22 = ssub.s32 %s16, 2
      %s23 = sadd.s32 %s16, 1
      %s24 = ssub.s32 %s16, %s23
      %p25 = scmp.eq.s32.totalorder %s24, 0
      %s27 = sadd.s32 %s26, 1
      %s28 = scalar_select %p25, %s26, %s27
      %p31 = pneg %p25
      %p32 = scmp.eq.s32.totalorder %s16, 1
      %p33 = por %p31, %p32
      %p34 = scmp.ne.s32.totalorder %s26, %s29
      %p35 = scmp.eq.s32.totalorder %s16, 0
      %p36 = por %p34, %p35
      %p37 = scmp.ne.s32.totalorder %s26, %s29
      %p38 = scmp.eq.s32.totalorder %s21, 1
      %p39 = por %p37, %p38
      %p40 = scmp.ne.s32.totalorder %s29, %s30
      %p41 = scmp.eq.s32.totalorder %s21, 0
      %p42 = por %p40, %p41
      %p43 = scmp.ne.s32.totalorder %s29, %s30
      %p44 = scmp.eq.s32.totalorder %s22, 1
      %p45 = por %p43, %p44
      %p47 = scmp.ne.s32.totalorder %s30, %s46
      %p48 = scmp.eq.s32.totalorder %s22, 0
      %p49 = por %p47, %p48
      %s51 = sadd.s32 %s50, 1
      %p54 = scmp.eq.s32.totalorder %s16, 1
      %p55 = scmp.ne.s32.totalorder %s50, %s52
      %p56 = scmp.eq.s32.totalorder %s16, 0
      %p57 = por %p55, %p56
      %p58 = scmp.ne.s32.totalorder %s50, %s52
      %p59 = scmp.eq.s32.totalorder %s21, 1
      %p60 = por %p58, %p59
      %p61 = scmp.ne.s32.totalorder %s52, %s53
      %p62 = scmp.eq.s32.totalorder %s21, 0
      %p63 = por %p61, %p62
      %p64 = scmp.ne.s32.totalorder %s52, %s53
      %p65 = scmp.eq.s32.totalorder %s22, 1
      %p66 = por %p64, %p65
      %p68 = scmp.ne.s32.totalorder %s53, %s67
      %p69 = scmp.eq.s32.totalorder %s22, 0
      %p70 = por %p68, %p69
      %s72 = sadd.s32 %s71, 1
      %p75 = scmp.eq.s32.totalorder %s16, 1
      %p76 = scmp.ne.s32.totalorder %s71, %s73
      %p77 = scmp.eq.s32.totalorder %s16, 0
      %p78 = por %p76, %p77
      %p79 = scmp.ne.s32.totalorder %s71, %s73
      %p80 = scmp.eq.s32.totalorder %s21, 1
      %p81 = por %p79, %p80
      %p82 = scmp.ne.s32.totalorder %s73, %s74
      %p83 = scmp.eq.s32.totalorder %s21, 0
      %p84 = por %p82, %p83
      %p85 = scmp.ne.s32.totalorder %s73, %s74
      %p86 = scmp.eq.s32.totalorder %s22, 1
      %p87 = por %p85, %p86
      %p89 = scmp.ne.s32.totalorder %s74, %s88
      %p90 = scmp.eq.s32.totalorder %s22, 0
      %p91 = por %p89, %p90
      %s92 = ssub.s32 %s16, %s23
      %p93 = scmp.eq.s32.totalorder %s92, 0
      %s95 = sadd.s32 %s94, 1
      %s96 = scalar_select %p93, %s94, %s95
      %p99 = pneg %p93
      %p100 = scmp.eq.s32.totalorder %s16, 1
      %p101 = por %p99, %p100
      %p102 = scmp.ne.s32.totalorder %s94, %s97
      %p103 = scmp.eq.s32.totalorder %s16, 0
      %p104 = por %p102, %p103
      %p105 = scmp.ne.s32.totalorder %s94, %s97
      %p106 = scmp.eq.s32.totalorder %s21, 1
      %p107 = por %p105, %p106
      %p108 = scmp.ne.s32.totalorder %s97, %s98
      %p109 = scmp.eq.s32.totalorder %s21, 0
      %p110 = por %p108, %p109
      %p111 = scmp.ne.s32.totalorder %s97, %s98
      %p112 = scmp.eq.s32.totalorder %s22, 1
      %p113 = por %p111, %p112
      %p115 = scmp.ne.s32.totalorder %s98, %s114
      %p116 = scmp.eq.s32.totalorder %s22, 0
      %p117 = por %p115, %p116
      %p118 = scmp.le.s32.totalorder 1, %s16
      %p119 = scmp.lt.s32.totalorder %s16, 3
      %p120 = pnand %p118, %p119
      %p121 = pneg %p120
      // Predicated region
      $region9: #{tpu_custom_call.1} parent=5 // pred_check
        _
      $region10: #{tpu_custom_call.1} parent=5 // pred_check_branch
        %123 = sbr.rel (%p120) target = $region12
      $region11: #{tpu_custom_call.1} parent=5 // pred_region
        %s124 = ssub.s32 %s16, 1
        // Predicated region
        $region13: #{tpu_custom_call.1} parent=11 // pred_check
          %p125 = pneg %p63
        $region14: #{tpu_custom_call.1} parent=11 // pred_check_branch
          %127 = sbr.rel (%p125) target = $region16
        $region15: #{tpu_custom_call.1} parent=11 // pred_region
          %129 = vsyncadd [#allocation6], 0
          %s130 = sshll.u32 %s1, 4
          %s131 = int_to_ptr.hbm [resolvable:$true] %s130
          %s132 = sshll.u32 [#allocation5], 4
          %s133 = int_to_ptr.vmem [resolvable:$true] %s132
          %138 = dma.hbm_to_vmem [thread:$0]  %s131, 15360, %s133, [#allocation6], 256, 256, 16
        $region16: #{tpu_custom_call.1} parent=11 // pred_fallthru
          _
        // Predicated region
        $region17: #{tpu_custom_call.1} parent=11 // pred_check
          %p139 = pneg %p84
        $region18: #{tpu_custom_call.1} parent=11 // pred_check_branch
          %141 = sbr.rel (%p139) target = $region20
        $region19: #{tpu_custom_call.1} parent=11 // pred_region
          %143 = vsyncadd [#allocation6], 0
          %s144 = sshll.u32 %s2, 4
          %s145 = int_to_ptr.hbm [resolvable:$true] %s144
          %s146 = sshll.u32 [#allocation7], 4
          %s147 = int_to_ptr.vmem [resolvable:$true] %s146
          %152 = dma.hbm_to_vmem [thread:$0]  %s145, 2048, %s147, [#allocation6], 64, 64, 4
        $region20: #{tpu_custom_call.1} parent=11 // pred_fallthru
          _
      $region12: #{tpu_custom_call.1} parent=5 // pred_fallthru
        _
      %p153 = scmp.lt.s32.totalorder %s16, 2
      // Predicated region
      $region21: #{tpu_custom_call.1} parent=5 // pred_check
        %p154 = pneg %p153
      $region22: #{tpu_custom_call.1} parent=5 // pred_check_branch
        %156 = sbr.rel (%p154) target = $region24
      $region23: #{tpu_custom_call.1} parent=5 // pred_region
        // Predicated region
        $region25: #{tpu_custom_call.1} parent=23 // pred_check
          %p157 = pneg %p36
        $region26: #{tpu_custom_call.1} parent=23 // pred_check_branch
          %159 = sbr.rel (%p157) target = $region28
        $region27: #{tpu_custom_call.1} parent=23 // pred_region
          %s160 = sand.u32 %s26, 1
          %s161 = scalar_lea.sflag [#allocation3], %s160
          %s162 = sand.u32 %s26, 1
          %s163 = smul.addr %s162, 32
          %s164 = scalar_lea.vmem [#allocation2], %s163
          %166 = vsyncadd %s161, 0
          %s167 = smul.addr %s16, 8
          %s168 = smul.addr %s167, 4
          %s169 = scalar_lea.hbm %s0, %s168
          %s170 = sshll.u32 %s169, 4
          %s171 = int_to_ptr.hbm [resolvable:$true] %s170
          %s172 = sshll.u32 %s164, 4
          %s173 = int_to_ptr.vmem [resolvable:$true] %s172
          %178 = dma.hbm_to_vmem [thread:$0]  %s171, 512, %s173, %s161, 128, 128, 8
        $region28: #{tpu_custom_call.1} parent=23 // pred_fallthru
          _
      $region24: #{tpu_custom_call.1} parent=5 // pred_fallthru
        _
      %p179 = scmp.le.s32.totalorder 1, %s16
      %p180 = scmp.lt.s32.totalorder %s16, 3
      %p181 = pnand %p179, %p180
      %p182 = pneg %p181
      // Predicated region
      $region29: #{tpu_custom_call.1} parent=5 // pred_check
        _
      $region30: #{tpu_custom_call.1} parent=5 // pred_check_branch
        %184 = sbr.rel (%p181) target = $region32
      $region31: #{tpu_custom_call.1} parent=5 // pred_region
        %s185 = ssub.s32 %s16, 1
        %s186 = sand.u32 %s29, 1
        %s187 = scalar_lea.sflag [#allocation3], %s186
        %s188 = sand.u32 %s29, 1
        %s189 = smul.addr %s188, 32
        %s190 = scalar_lea.vmem [#allocation2], %s189
        // Predicated region
        $region33: #{tpu_custom_call.1} parent=31 // pred_check
          %p191 = pneg %p42
        $region34: #{tpu_custom_call.1} parent=31 // pred_check_branch
          %193 = sbr.rel (%p191) target = $region36
        $region35: #{tpu_custom_call.1} parent=31 // pred_region
          %195 = dma.done %s187, 512
        $region36: #{tpu_custom_call.1} parent=31 // pred_fallthru
          _
        // Predicated region
        $region37: #{tpu_custom_call.1} parent=31 // pred_check
          %p196 = pneg %p63
        $region38: #{tpu_custom_call.1} parent=31 // pred_check_branch
          %198 = sbr.rel (%p196) target = $region40
        $region39: #{tpu_custom_call.1} parent=31 // pred_region
          %200 = dma.done [#allocation6], 15360
        $region40: #{tpu_custom_call.1} parent=31 // pred_fallthru
          _
        // Predicated region
        $region41: #{tpu_custom_call.1} parent=31 // pred_check
          %p201 = pneg %p84
        $region42: #{tpu_custom_call.1} parent=31 // pred_check_branch
          %203 = sbr.rel (%p201) target = $region44
        $region43: #{tpu_custom_call.1} parent=31 // pred_region
          %205 = dma.done [#allocation6], 2048
        $region44: #{tpu_custom_call.1} parent=31 // pred_fallthru
          _
        %s206 = sand.u32 %s29, 1
        %s207 = scalar_lea.sflag [#allocation3], %s206
        %s208 = sand.u32 %s29, 1
        %s209 = smul.addr %s208, 32
        %s210 = scalar_lea.vmem [#allocation2], %s209
        %p211 = pneg %p42
        %p212 = pneg %p39
        %p213 = pneg %p63
        %p214 = pneg %p60
        %p215 = pneg %p84
        %p216 = pneg %p81
        %p217 = pneg %p110
        %p218 = pneg %p107
        %s219 = sand.u32 %s97, 1
        %s220 = scalar_lea.sflag [#allocation4], %s219
        %s221 = sand.u32 %s97, 1
        %s222 = smul.addr %s221, 24
        %s223 = scalar_lea.vmem [#allocation8], %s222
        %s224 = smul.u32 3, %s21
        %v226 = vld [vmem:[%s190] sm:$0xff]
        %v227 = vld [vmem:[%s190 + $0x8] sm:$0xff]
        %v228 = vld [vmem:[%s190 + $0x10] sm:$0xff]
        %v229 = vld [vmem:[%s190 + $0x18] sm:$0xff]
        %v230 = vunpack.c.l.bf16 %v226
        %v231 = vunpack.c.h.bf16 %v226
        %v232 = vunpack.c.l.bf16 %v227
        %v233 = vunpack.c.h.bf16 %v227
        %v234 = vunpack.c.l.bf16 %v228
        %v235 = vunpack.c.h.bf16 %v228
        %v236 = vunpack.c.l.bf16 %v229
        %v237 = vunpack.c.h.bf16 %v229
        %v238 = vld [vmem:[#allocation5] sm:$0xff]
        %v239 = vld [vmem:[#allocation5 + $0x8] sm:$0xff]
        %v240 = vld [vmem:[#allocation5 + $0x10] sm:$0xff]
        %v241 = vld [vmem:[#allocation5 + $0x18] sm:$0xff]
        %v242 = vld [vmem:[#allocation5 + $0x20] sm:$0xff]
        %v243 = vld [vmem:[#allocation5 + $0x28] sm:$0xff]
        %v244 = vld [vmem:[#allocation5 + $0x30] sm:$0xff]
        %v245 = vld [vmem:[#allocation5 + $0x38] sm:$0xff]
        %v246 = vld [vmem:[#allocation5 + $0x40] sm:$0xff]
        %v247 = vld [vmem:[#allocation5 + $0x48] sm:$0xff]
        %v248 = vld [vmem:[#allocation5 + $0x50] sm:$0xff]
        %v249 = vld [vmem:[#allocation5 + $0x58] sm:$0xff]
        %v250 = vld [vmem:[#allocation5 + $0x60] sm:$0xff]
        %v251 = vld [vmem:[#allocation5 + $0x68] sm:$0xff]
        %v252 = vld [vmem:[#allocation5 + $0x70] sm:$0xff]
        %v253 = vld [vmem:[#allocation5 + $0x78] sm:$0xff]
        %v254 = vld [vmem:[#allocation5 + $0x80] sm:$0xff]
        %v255 = vld [vmem:[#allocation5 + $0x88] sm:$0xff]
        %v256 = vld [vmem:[#allocation5 + $0x90] sm:$0xff]
        %v257 = vld [vmem:[#allocation5 + $0x98] sm:$0xff]
        %v258 = vld [vmem:[#allocation5 + $0xa0] sm:$0xff]
        %v259 = vld [vmem:[#allocation5 + $0xa8] sm:$0xff]
        %v260 = vld [vmem:[#allocation5 + $0xb0] sm:$0xff]
        %v261 = vld [vmem:[#allocation5 + $0xb8] sm:$0xff]
        %v262 = vld [vmem:[#allocation5 + $0xc0] sm:$0xff]
        %v263 = vld [vmem:[#allocation5 + $0xc8] sm:$0xff]
        %v264 = vld [vmem:[#allocation5 + $0xd0] sm:$0xff]
        %v265 = vld [vmem:[#allocation5 + $0xd8] sm:$0xff]
        %v266 = vld [vmem:[#allocation5 + $0xe0] sm:$0xff]
        %v267 = vld [vmem:[#allocation5 + $0xe8] sm:$0xff]
        %v268 = vld [vmem:[#allocation5 + $0xf0] sm:$0xff]
        %v269 = vld [vmem:[#allocation5 + $0xf8] sm:$0xff]
        %v270 = vld [vmem:[#allocation5 + $0x100] sm:$0xff]
        %v271 = vld [vmem:[#allocation5 + $0x108] sm:$0xff]
        %v272 = vld [vmem:[#allocation5 + $0x110] sm:$0xff]
        %v273 = vld [vmem:[#allocation5 + $0x118] sm:$0xff]
        %v274 = vld [vmem:[#allocation5 + $0x120] sm:$0xff]
        %v275 = vld [vmem:[#allocation5 + $0x128] sm:$0xff]
        %v276 = vld [vmem:[#allocation5 + $0x130] sm:$0xff]
        %v277 = vld [vmem:[#allocation5 + $0x138] sm:$0xff]
        %v278 = vld [vmem:[#allocation5 + $0x140] sm:$0xff]
        %v279 = vld [vmem:[#allocation5 + $0x148] sm:$0xff]
        %v280 = vld [vmem:[#allocation5 + $0x150] sm:$0xff]
        %v281 = vld [vmem:[#allocation5 + $0x158] sm:$0xff]
        %v282 = vld [vmem:[#allocation5 + $0x160] sm:$0xff]
        %v283 = vld [vmem:[#allocation5 + $0x168] sm:$0xff]
        %v284 = vld [vmem:[#allocation5 + $0x170] sm:$0xff]
        %v285 = vld [vmem:[#allocation5 + $0x178] sm:$0xff]
        %v286 = vld [vmem:[#allocation5 + $0x180] sm:$0xff]
        %v287 = vld [vmem:[#allocation5 + $0x188] sm:$0xff]
        %v288 = vld [vmem:[#allocation5 + $0x190] sm:$0xff]
        %v289 = vld [vmem:[#allocation5 + $0x198] sm:$0xff]
        %v290 = vld [vmem:[#allocation5 + $0x1a0] sm:$0xff]
        %v291 = vld [vmem:[#allocation5 + $0x1a8] sm:$0xff]
        %v292 = vld [vmem:[#allocation5 + $0x1b0] sm:$0xff]
        %v293 = vld [vmem:[#allocation5 + $0x1b8] sm:$0xff]
        %v294 = vld [vmem:[#allocation5 + $0x1c0] sm:$0xff]
        %v295 = vld [vmem:[#allocation5 + $0x1c8] sm:$0xff]
        %v296 = vld [vmem:[#allocation5 + $0x1d0] sm:$0xff]
        %v297 = vld [vmem:[#allocation5 + $0x1d8] sm:$0xff]
        %v298 = vld [vmem:[#allocation5 + $0x1e0] sm:$0xff]
        %v299 = vld [vmem:[#allocation5 + $0x1e8] sm:$0xff]
        %v300 = vld [vmem:[#allocation5 + $0x1f0] sm:$0xff]
        %v301 = vld [vmem:[#allocation5 + $0x1f8] sm:$0xff]
        %v302 = vld [vmem:[#allocation5 + $0x200] sm:$0xff]
        %v303 = vld [vmem:[#allocation5 + $0x208] sm:$0xff]
        %v304 = vld [vmem:[#allocation5 + $0x210] sm:$0xff]
        %v305 = vld [vmem:[#allocation5 + $0x218] sm:$0xff]
        %v306 = vld [vmem:[#allocation5 + $0x220] sm:$0xff]
        %v307 = vld [vmem:[#allocation5 + $0x228] sm:$0xff]
        %v308 = vld [vmem:[#allocation5 + $0x230] sm:$0xff]
        %v309 = vld [vmem:[#allocation5 + $0x238] sm:$0xff]
        %v310 = vld [vmem:[#allocation5 + $0x240] sm:$0xff]
        %v311 = vld [vmem:[#allocation5 + $0x248] sm:$0xff]
        %v312 = vld [vmem:[#allocation5 + $0x250] sm:$0xff]
        %v313 = vld [vmem:[#allocation5 + $0x258] sm:$0xff]
        %v314 = vld [vmem:[#allocation5 + $0x260] sm:$0xff]
        %v315 = vld [vmem:[#allocation5 + $0x268] sm:$0xff]
        %v316 = vld [vmem:[#allocation5 + $0x270] sm:$0xff]
        %v317 = vld [vmem:[#allocation5 + $0x278] sm:$0xff]
        %v318 = vld [vmem:[#allocation5 + $0x280] sm:$0xff]
        %v319 = vld [vmem:[#allocation5 + $0x288] sm:$0xff]
        %v320 = vld [vmem:[#allocation5 + $0x290] sm:$0xff]
        %v321 = vld [vmem:[#allocation5 + $0x298] sm:$0xff]
        %v322 = vld [vmem:[#allocation5 + $0x2a0] sm:$0xff]
        %v323 = vld [vmem:[#allocation5 + $0x2a8] sm:$0xff]
        %v324 = vld [vmem:[#allocation5 + $0x2b0] sm:$0xff]
        %v325 = vld [vmem:[#allocation5 + $0x2b8] sm:$0xff]
        %v326 = vld [vmem:[#allocation5 + $0x2c0] sm:$0xff]
        %v327 = vld [vmem:[#allocation5 + $0x2c8] sm:$0xff]
        %v328 = vld [vmem:[#allocation5 + $0x2d0] sm:$0xff]
        %v329 = vld [vmem:[#allocation5 + $0x2d8] sm:$0xff]
        %v330 = vld [vmem:[#allocation5 + $0x2e0] sm:$0xff]
        %v331 = vld [vmem:[#allocation5 + $0x2e8] sm:$0xff]
        %v332 = vld [vmem:[#allocation5 + $0x2f0] sm:$0xff]
        %v333 = vld [vmem:[#allocation5 + $0x2f8] sm:$0xff]
        %v334 = vld [vmem:[#allocation5 + $0x300] sm:$0xff]
        %v335 = vld [vmem:[#allocation5 + $0x308] sm:$0xff]
        %v336 = vld [vmem:[#allocation5 + $0x310] sm:$0xff]
        %v337 = vld [vmem:[#allocation5 + $0x318] sm:$0xff]
        %v338 = vld [vmem:[#allocation5 + $0x320] sm:$0xff]
        %v339 = vld [vmem:[#allocation5 + $0x328] sm:$0xff]
        %v340 = vld [vmem:[#allocation5 + $0x330] sm:$0xff]
        %v341 = vld [vmem:[#allocation5 + $0x338] sm:$0xff]
        %v342 = vld [vmem:[#allocation5 + $0x340] sm:$0xff]
        %v343 = vld [vmem:[#allocation5 + $0x348] sm:$0xff]
        %v344 = vld [vmem:[#allocation5 + $0x350] sm:$0xff]
        %v345 = vld [vmem:[#allocation5 + $0x358] sm:$0xff]
        %v346 = vld [vmem:[#allocation5 + $0x360] sm:$0xff]
        %v347 = vld [vmem:[#allocation5 + $0x368] sm:$0xff]
        %v348 = vld [vmem:[#allocation5 + $0x370] sm:$0xff]
        %v349 = vld [vmem:[#allocation5 + $0x378] sm:$0xff]
        %v350 = vld [vmem:[#allocation5 + $0x380] sm:$0xff]
        %v351 = vld [vmem:[#allocation5 + $0x388] sm:$0xff]
        %v352 = vld [vmem:[#allocation5 + $0x390] sm:$0xff]
        %v353 = vld [vmem:[#allocation5 + $0x398] sm:$0xff]
        %v354 = vld [vmem:[#allocation5 + $0x3a0] sm:$0xff]
        %v355 = vld [vmem:[#allocation5 + $0x3a8] sm:$0xff]
        %v356 = vld [vmem:[#allocation5 + $0x3b0] sm:$0xff]
        %v357 = vld [vmem:[#allocation5 + $0x3b8] sm:$0xff]
        %v358 = vpack.c.bf16 %v232, %v230
        %v359 = vpack.c.bf16 %v233, %v231
        %v360 = vpack.c.bf16 %v234, %v234
        %v361 = vpack.c.bf16 %v235, %v235
        %v362 = vpack.c.bf16 %v236, %v234
        %v363 = vpack.c.bf16 %v237, %v235
        %vm364 = vsmask.f32 7424
        %v366 = vshrl.u32 %v358, 16
        %v368 = vshll.u32 %v358, 16
        %v370 = vrot.slane %v368, 1
        %v371 = vor.u32 %v366, %v370
        %v373 = vshll.u32 %v362, 16
        %v375 = vrot.slane %v373, 1
        %v376 = vsel %vm364, %v371, %v375
        %v378 = vshrl.u32 %v359, 16
        %v380 = vshll.u32 %v359, 16
        %v382 = vrot.slane %v380, 1
        %v383 = vor.u32 %v378, %v382
        %v385 = vshll.u32 %v363, 16
        %v387 = vrot.slane %v385, 1
        %v388 = vsel %vm364, %v383, %v387
        %v389 = vshrl.u32 %v362, 16
        %v391 = vor.u32 %v389, %v375
        %v392 = vshrl.u32 %v363, 16
        %v394 = vor.u32 %v392, %v387
        %v437 = vunpack.c.l.b16 %v278
        %v438 = vunpack.c.h.b16 %v278
        %v439 = vunpack.c.l.b16 %v279
        %v440 = vunpack.c.h.b16 %v279
        %v441 = vunpack.c.l.b16 %v280
        %v442 = vunpack.c.h.b16 %v280
        %v443 = vunpack.c.l.b16 %v281
        %v444 = vunpack.c.h.b16 %v281
        %v445 = vunpack.c.l.b16 %v282
        %v446 = vunpack.c.h.b16 %v282
        %v447 = vunpack.c.l.b16 %v283
        %v448 = vunpack.c.h.b16 %v283
        %v449 = vunpack.c.l.b16 %v284
        %v450 = vunpack.c.h.b16 %v284
        %v451 = vunpack.c.l.b16 %v285
        %v452 = vunpack.c.h.b16 %v285
        %v453 = vunpack.c.l.b16 %v286
        %v454 = vunpack.c.h.b16 %v286
        %v455 = vunpack.c.l.b16 %v287
        %v456 = vunpack.c.h.b16 %v287
        %v457 = vunpack.c.l.b16 %v288
        %v458 = vunpack.c.h.b16 %v288
        %v459 = vunpack.c.l.b16 %v289
        %v460 = vunpack.c.h.b16 %v289
        %v461 = vunpack.c.l.b16 %v290
        %v462 = vunpack.c.h.b16 %v290
        %v463 = vunpack.c.l.b16 %v291
        %v464 = vunpack.c.h.b16 %v291
        %v465 = vunpack.c.l.b16 %v292
        %v466 = vunpack.c.h.b16 %v292
        %v467 = vunpack.c.l.b16 %v293
        %v468 = vunpack.c.h.b16 %v293
        %v469 = vunpack.c.l.b16 %v294
        %v470 = vunpack.c.h.b16 %v294
        %v471 = vunpack.c.l.b16 %v295
        %v472 = vunpack.c.h.b16 %v295
        %v473 = vunpack.c.l.b16 %v296
        %v474 = vunpack.c.h.b16 %v296
        %v475 = vunpack.c.l.b16 %v297
        %v476 = vunpack.c.h.b16 %v297
        %v477 = vunpack.c.l.b16 %v298
        %v478 = vunpack.c.h.b16 %v298
        %v479 = vunpack.c.l.b16 %v299
        %v480 = vunpack.c.h.b16 %v299
        %v481 = vunpack.c.l.b16 %v300
        %v482 = vunpack.c.h.b16 %v300
        %v483 = vunpack.c.l.b16 %v301
        %v484 = vunpack.c.h.b16 %v301
        %v485 = vunpack.c.l.b16 %v302
        %v486 = vunpack.c.h.b16 %v302
        %v487 = vunpack.c.l.b16 %v303
        %v488 = vunpack.c.h.b16 %v303
        %v489 = vunpack.c.l.b16 %v304
        %v490 = vunpack.c.h.b16 %v304
        %v491 = vunpack.c.l.b16 %v305
        %v492 = vunpack.c.h.b16 %v305
        %v493 = vunpack.c.l.b16 %v306
        %v494 = vunpack.c.h.b16 %v306
        %v495 = vunpack.c.l.b16 %v307
        %v496 = vunpack.c.h.b16 %v307
        %v497 = vunpack.c.l.b16 %v308
        %v498 = vunpack.c.h.b16 %v308
        %v499 = vunpack.c.l.b16 %v309
        %v500 = vunpack.c.h.b16 %v309
        %v501 = vunpack.c.l.b16 %v310
        %v502 = vunpack.c.h.b16 %v310
        %v503 = vunpack.c.l.b16 %v311
        %v504 = vunpack.c.h.b16 %v311
        %v505 = vunpack.c.l.b16 %v312
        %v506 = vunpack.c.h.b16 %v312
        %v507 = vunpack.c.l.b16 %v313
        %v508 = vunpack.c.h.b16 %v313
        %v509 = vunpack.c.l.b16 %v314
        %v510 = vunpack.c.h.b16 %v314
        %v511 = vunpack.c.l.b16 %v315
        %v512 = vunpack.c.h.b16 %v315
        %v513 = vunpack.c.l.b16 %v316
        %v514 = vunpack.c.h.b16 %v316
        %v515 = vunpack.c.l.b16 %v317
        %v516 = vunpack.c.h.b16 %v317
        %v517 = vpack.c.b16 %v441, %v437
        %v518 = vpack.c.b16 %v442, %v438
        %v519 = vpack.c.b16 %v443, %v439
        %v520 = vpack.c.b16 %v444, %v440
        %v521 = vpack.c.b16 %v449, %v445
        %v522 = vpack.c.b16 %v450, %v446
        %v523 = vpack.c.b16 %v451, %v447
        %v524 = vpack.c.b16 %v452, %v448
        %v525 = vpack.c.b16 %v457, %v453
        %v526 = vpack.c.b16 %v458, %v454
        %v527 = vpack.c.b16 %v459, %v455
        %v528 = vpack.c.b16 %v460, %v456
        %v529 = vpack.c.b16 %v465, %v461
        %v530 = vpack.c.b16 %v466, %v462
        %v531 = vpack.c.b16 %v467, %v463
        %v532 = vpack.c.b16 %v468, %v464
        %v533 = vpack.c.b16 %v473, %v469
        %v534 = vpack.c.b16 %v474, %v470
        %v535 = vpack.c.b16 %v475, %v471
        %v536 = vpack.c.b16 %v476, %v472
        %v537 = vpack.c.b16 %v481, %v477
        %v538 = vpack.c.b16 %v482, %v478
        %v539 = vpack.c.b16 %v483, %v479
        %v540 = vpack.c.b16 %v484, %v480
        %v541 = vpack.c.b16 %v489, %v485
        %v542 = vpack.c.b16 %v490, %v486
        %v543 = vpack.c.b16 %v491, %v487
        %v544 = vpack.c.b16 %v492, %v488
        %v545 = vpack.c.b16 %v497, %v493
        %v546 = vpack.c.b16 %v498, %v494
        %v547 = vpack.c.b16 %v499, %v495
        %v548 = vpack.c.b16 %v500, %v496
        %v549 = vpack.c.b16 %v505, %v501
        %v550 = vpack.c.b16 %v506, %v502
        %v551 = vpack.c.b16 %v507, %v503
        %v552 = vpack.c.b16 %v508, %v504
        %v553 = vpack.c.b16 %v513, %v509
        %v554 = vpack.c.b16 %v514, %v510
        %v555 = vpack.c.b16 %v515, %v511
        %v556 = vpack.c.b16 %v516, %v512
        %vm597 = vcmask 261120
        %v599 = vsel %vm597, %v388, 0
        %v602 = vsel %vm597, %v394, 0
        %604 = vmatpush.bf16.msra.mxu0 %v545
        %605 = vmatpush.bf16.msra.mxu0 %v541
        %606 = vmatpush.bf16.msra.mxu0 %v537
        %607 = vmatpush.bf16.msra.mxu0 %v533
        %608 = vmatpush.bf16.msra.mxu0 %v529
        %609 = vmatpush.bf16.msra.mxu0 %v525
        %610 = vmatpush.bf16.msra.mxu0 %v521
        %611 = vmatpush.bf16.msra.mxu0 %v517
        %612 = vmatmul.bf16.gmra.mxu0 %v376
        %v613 = vpop.f32.mrf.mxu0
        %v614 = vadd.f32 0.0, %v613
        %v615 = vpop.f32.mrf.mxu0
        %v616 = vadd.f32 0.0, %v615
        %617 = vmatmul.bf16.gmra.mxu0 %v391
        %v618 = vpop.f32.mrf.mxu0
        %v619 = vadd.f32 0.0, %v618
        %v620 = vpop.f32.mrf.mxu0
        %621 = vdwg.mxu0
        %622 = vmatpush.bf16.msra.mxu0 0
        %623 = vmatpush.bf16.msra.mxu0 0
        %624 = vmatpush.bf16.msra.mxu0 0
        %625 = vmatpush.bf16.msra.mxu0 0
        %626 = vmatpush.bf16.msra.mxu0 0
        %627 = vmatpush.bf16.msra.mxu0 0
        %628 = vmatpush.bf16.msra.mxu0 %v553
        %629 = vmatpush.bf16.msra.mxu0 %v549
        %630 = vmatmul.bf16.gmra.mxu0 %v599
        %v631 = vpop.f32.mrf.mxu0
        %v632 = vadd.f32 %v614, %v631
        %v633 = vpop.f32.mrf.mxu0
        %v634 = vadd.f32 %v616, %v633
        %635 = vmatmul.bf16.gmra.mxu0 %v602
        %v636 = vpop.f32.mrf.mxu0
        %v637 = vadd.f32 %v619, %v636
        %v638 = vpop.f32.mrf.mxu0
        %639 = vdwg.mxu0
        %640 = vmatpush.bf16.msra.mxu0 %v546
        %641 = vmatpush.bf16.msra.mxu0 %v542
        %642 = vmatpush.bf16.msra.mxu0 %v538
        %643 = vmatpush.bf16.msra.mxu0 %v534
        %644 = vmatpush.bf16.msra.mxu0 %v530
        %645 = vmatpush.bf16.msra.mxu0 %v526
        %646 = vmatpush.bf16.msra.mxu0 %v522
        %647 = vmatpush.bf16.msra.mxu0 %v518
        %648 = vmatmul.bf16.gmra.mxu0 %v376
        %v649 = vpop.f32.mrf.mxu0
        %v650 = vadd.f32 0.0, %v649
        %v651 = vpop.f32.mrf.mxu0
        %v652 = vadd.f32 0.0, %v651
        %653 = vmatmul.bf16.gmra.mxu0 %v391
        %v654 = vpop.f32.mrf.mxu0
        %v655 = vadd.f32 0.0, %v654
        %v656 = vpop.f32.mrf.mxu0
        %657 = vdwg.mxu0
        %658 = vmatpush.bf16.msra.mxu0 0
        %659 = vmatpush.bf16.msra.mxu0 0
        %660 = vmatpush.bf16.msra.mxu0 0
        %661 = vmatpush.bf16.msra.mxu0 0
        %662 = vmatpush.bf16.msra.mxu0 0
        %663 = vmatpush.bf16.msra.mxu0 0
        %664 = vmatpush.bf16.msra.mxu0 %v554
        %665 = vmatpush.bf16.msra.mxu0 %v550
        %666 = vmatmul.bf16.gmra.mxu0 %v599
        %v667 = vpop.f32.mrf.mxu0
        %v668 = vadd.f32 %v650, %v667
        %v669 = vpop.f32.mrf.mxu0
        %v670 = vadd.f32 %v652, %v669
        %671 = vmatmul.bf16.gmra.mxu0 %v602
        %v672 = vpop.f32.mrf.mxu0
        %v673 = vadd.f32 %v655, %v672
        %v674 = vpop.f32.mrf.mxu0
        %675 = vdwg.mxu0
        %676 = vmatpush.bf16.msra.mxu0 %v547
        %677 = vmatpush.bf16.msra.mxu0 %v543
        %678 = vmatpush.bf16.msra.mxu0 %v539
        %679 = vmatpush.bf16.msra.mxu0 %v535
        %680 = vmatpush.bf16.msra.mxu0 %v531
        %681 = vmatpush.bf16.msra.mxu0 %v527
        %682 = vmatpush.bf16.msra.mxu0 %v523
        %683 = vmatpush.bf16.msra.mxu0 %v519
        %684 = vmatmul.bf16.gmra.mxu0 %v376
        %v685 = vpop.f32.mrf.mxu0
        %v686 = vadd.f32 0.0, %v685
        %v687 = vpop.f32.mrf.mxu0
        %v688 = vadd.f32 0.0, %v687
        %689 = vmatmul.bf16.gmra.mxu0 %v391
        %v690 = vpop.f32.mrf.mxu0
        %v691 = vadd.f32 0.0, %v690
        %v692 = vpop.f32.mrf.mxu0
        %693 = vdwg.mxu0
        %694 = vmatpush.bf16.msra.mxu0 0
        %695 = vmatpush.bf16.msra.mxu0 0
        %696 = vmatpush.bf16.msra.mxu0 0
        %697 = vmatpush.bf16.msra.mxu0 0
        %698 = vmatpush.bf16.msra.mxu0 0
        %699 = vmatpush.bf16.msra.mxu0 0
        %700 = vmatpush.bf16.msra.mxu0 %v555
        %701 = vmatpush.bf16.msra.mxu0 %v551
        %702 = vmatmul.bf16.gmra.mxu0 %v599
        %v703 = vpop.f32.mrf.mxu0
        %v704 = vadd.f32 %v686, %v703
        %v705 = vpop.f32.mrf.mxu0
        %v706 = vadd.f32 %v688, %v705
        %707 = vmatmul.bf16.gmra.mxu0 %v602
        %v708 = vpop.f32.mrf.mxu0
        %v709 = vadd.f32 %v691, %v708
        %v710 = vpop.f32.mrf.mxu0
        %711 = vdwg.mxu0
        %712 = vmatpush.bf16.msra.mxu0 %v548
        %713 = vmatpush.bf16.msra.mxu0 %v544
        %714 = vmatpush.bf16.msra.mxu0 %v540
        %715 = vmatpush.bf16.msra.mxu0 %v536
        %716 = vmatpush.bf16.msra.mxu0 %v532
        %717 = vmatpush.bf16.msra.mxu0 %v528
        %718 = vmatpush.bf16.msra.mxu0 %v524
        %719 = vmatpush.bf16.msra.mxu0 %v520
        %720 = vmatmul.bf16.gmra.mxu0 %v376
        %v721 = vpop.f32.mrf.mxu0
        %v722 = vadd.f32 0.0, %v721
        %v723 = vpop.f32.mrf.mxu0
        %v724 = vadd.f32 0.0, %v723
        %725 = vmatmul.bf16.gmra.mxu0 %v391
        %v726 = vpop.f32.mrf.mxu0
        %v727 = vadd.f32 0.0, %v726
        %v728 = vpop.f32.mrf.mxu0
        %729 = vdwg.mxu0
        %730 = vmatpush.bf16.msra.mxu0 0
        %731 = vmatpush.bf16.msra.mxu0 0
        %732 = vmatpush.bf16.msra.mxu0 0
        %733 = vmatpush.bf16.msra.mxu0 0
        %734 = vmatpush.bf16.msra.mxu0 0
        %735 = vmatpush.bf16.msra.mxu0 0
        %736 = vmatpush.bf16.msra.mxu0 %v556
        %737 = vmatpush.bf16.msra.mxu0 %v552
        %738 = vmatmul.bf16.gmra.mxu0 %v599
        %v739 = vpop.f32.mrf.mxu0
        %v740 = vadd.f32 %v722, %v739
        %v741 = vpop.f32.mrf.mxu0
        %v742 = vadd.f32 %v724, %v741
        %743 = vmatmul.bf16.gmra.mxu0 %v602
        %v744 = vpop.f32.mrf.mxu0
        %v745 = vadd.f32 %v727, %v744
        %v746 = vpop.f32.mrf.mxu0
        %747 = vdwg.mxu0
        %v788 = vunpack.c.l.b16 %v238
        %v789 = vunpack.c.h.b16 %v238
        %v790 = vunpack.c.l.b16 %v239
        %v791 = vunpack.c.h.b16 %v239
        %v792 = vunpack.c.l.b16 %v240
        %v793 = vunpack.c.h.b16 %v240
        %v794 = vunpack.c.l.b16 %v241
        %v795 = vunpack.c.h.b16 %v241
        %v796 = vunpack.c.l.b16 %v242
        %v797 = vunpack.c.h.b16 %v242
        %v798 = vunpack.c.l.b16 %v243
        %v799 = vunpack.c.h.b16 %v243
        %v800 = vunpack.c.l.b16 %v244
        %v801 = vunpack.c.h.b16 %v244
        %v802 = vunpack.c.l.b16 %v245
        %v803 = vunpack.c.h.b16 %v245
        %v804 = vunpack.c.l.b16 %v246
        %v805 = vunpack.c.h.b16 %v246
        %v806 = vunpack.c.l.b16 %v247
        %v807 = vunpack.c.h.b16 %v247
        %v808 = vunpack.c.l.b16 %v248
        %v809 = vunpack.c.h.b16 %v248
        %v810 = vunpack.c.l.b16 %v249
        %v811 = vunpack.c.h.b16 %v249
        %v812 = vunpack.c.l.b16 %v250
        %v813 = vunpack.c.h.b16 %v250
        %v814 = vunpack.c.l.b16 %v251
        %v815 = vunpack.c.h.b16 %v251
        %v816 = vunpack.c.l.b16 %v252
        %v817 = vunpack.c.h.b16 %v252
        %v818 = vunpack.c.l.b16 %v253
        %v819 = vunpack.c.h.b16 %v253
        %v820 = vunpack.c.l.b16 %v254
        %v821 = vunpack.c.h.b16 %v254
        %v822 = vunpack.c.l.b16 %v255
        %v823 = vunpack.c.h.b16 %v255
        %v824 = vunpack.c.l.b16 %v256
        %v825 = vunpack.c.h.b16 %v256
        %v826 = vunpack.c.l.b16 %v257
        %v827 = vunpack.c.h.b16 %v257
        %v828 = vunpack.c.l.b16 %v258
        %v829 = vunpack.c.h.b16 %v258
        %v830 = vunpack.c.l.b16 %v259
        %v831 = vunpack.c.h.b16 %v259
        %v832 = vunpack.c.l.b16 %v260
        %v833 = vunpack.c.h.b16 %v260
        %v834 = vunpack.c.l.b16 %v261
        %v835 = vunpack.c.h.b16 %v261
        %v836 = vunpack.c.l.b16 %v262
        %v837 = vunpack.c.h.b16 %v262
        %v838 = vunpack.c.l.b16 %v263
        %v839 = vunpack.c.h.b16 %v263
        %v840 = vunpack.c.l.b16 %v264
        %v841 = vunpack.c.h.b16 %v264
        %v842 = vunpack.c.l.b16 %v265
        %v843 = vunpack.c.h.b16 %v265
        %v844 = vunpack.c.l.b16 %v266
        %v845 = vunpack.c.h.b16 %v266
        %v846 = vunpack.c.l.b16 %v267
        %v847 = vunpack.c.h.b16 %v267
        %v848 = vunpack.c.l.b16 %v268
        %v849 = vunpack.c.h.b16 %v268
        %v850 = vunpack.c.l.b16 %v269
        %v851 = vunpack.c.h.b16 %v269
        %v852 = vunpack.c.l.b16 %v270
        %v853 = vunpack.c.h.b16 %v270
        %v854 = vunpack.c.l.b16 %v271
        %v855 = vunpack.c.h.b16 %v271
        %v856 = vunpack.c.l.b16 %v272
        %v857 = vunpack.c.h.b16 %v272
        %v858 = vunpack.c.l.b16 %v273
        %v859 = vunpack.c.h.b16 %v273
        %v860 = vunpack.c.l.b16 %v274
        %v861 = vunpack.c.h.b16 %v274
        %v862 = vunpack.c.l.b16 %v275
        %v863 = vunpack.c.h.b16 %v275
        %v864 = vunpack.c.l.b16 %v276
        %v865 = vunpack.c.h.b16 %v276
        %v866 = vunpack.c.l.b16 %v277
        %v867 = vunpack.c.h.b16 %v277
        %v868 = vpack.c.b16 %v792, %v788
        %v869 = vpack.c.b16 %v793, %v789
        %v870 = vpack.c.b16 %v794, %v790
        %v871 = vpack.c.b16 %v795, %v791
        %v872 = vpack.c.b16 %v800, %v796
        %v873 = vpack.c.b16 %v801, %v797
        %v874 = vpack.c.b16 %v802, %v798
        %v875 = vpack.c.b16 %v803, %v799
        %v876 = vpack.c.b16 %v808, %v804
        %v877 = vpack.c.b16 %v809, %v805
        %v878 = vpack.c.b16 %v810, %v806
        %v879 = vpack.c.b16 %v811, %v807
        %v880 = vpack.c.b16 %v816, %v812
        %v881 = vpack.c.b16 %v817, %v813
        %v882 = vpack.c.b16 %v818, %v814
        %v883 = vpack.c.b16 %v819, %v815
        %v884 = vpack.c.b16 %v824, %v820
        %v885 = vpack.c.b16 %v825, %v821
        %v886 = vpack.c.b16 %v826, %v822
        %v887 = vpack.c.b16 %v827, %v823
        %v888 = vpack.c.b16 %v832, %v828
        %v889 = vpack.c.b16 %v833, %v829
        %v890 = vpack.c.b16 %v834, %v830
        %v891 = vpack.c.b16 %v835, %v831
        %v892 = vpack.c.b16 %v840, %v836
        %v893 = vpack.c.b16 %v841, %v837
        %v894 = vpack.c.b16 %v842, %v838
        %v895 = vpack.c.b16 %v843, %v839
        %v896 = vpack.c.b16 %v848, %v844
        %v897 = vpack.c.b16 %v849, %v845
        %v898 = vpack.c.b16 %v850, %v846
        %v899 = vpack.c.b16 %v851, %v847
        %v900 = vpack.c.b16 %v856, %v852
        %v901 = vpack.c.b16 %v857, %v853
        %v902 = vpack.c.b16 %v858, %v854
        %v903 = vpack.c.b16 %v859, %v855
        %v904 = vpack.c.b16 %v864, %v860
        %v905 = vpack.c.b16 %v865, %v861
        %v906 = vpack.c.b16 %v866, %v862
        %v907 = vpack.c.b16 %v867, %v863
        %v948 = vsel %vm597, %v359, 0
        %v951 = vsel %vm597, %v361, 0
        %953 = vmatpush.bf16.msra.mxu0 %v896
        %954 = vmatpush.bf16.msra.mxu0 %v892
        %955 = vmatpush.bf16.msra.mxu0 %v888
        %956 = vmatpush.bf16.msra.mxu0 %v884
        %957 = vmatpush.bf16.msra.mxu0 %v880
        %958 = vmatpush.bf16.msra.mxu0 %v876
        %959 = vmatpush.bf16.msra.mxu0 %v872
        %960 = vmatpush.bf16.msra.mxu0 %v868
        %961 = vmatmul.bf16.gmra.mxu0 %v358
        %v962 = vpop.f32.mrf.mxu0
        %v963 = vadd.f32 %v632, %v962
        %v964 = vpop.f32.mrf.mxu0
        %v965 = vadd.f32 %v634, %v964
        %966 = vmatmul.bf16.gmra.mxu0 %v360
        %v967 = vpop.f32.mrf.mxu0
        %v968 = vadd.f32 %v637, %v967
        %v969 = vpop.f32.mrf.mxu0
        %970 = vdwg.mxu0
        %971 = vmatpush.bf16.msra.mxu0 0
        %972 = vmatpush.bf16.msra.mxu0 0
        %973 = vmatpush.bf16.msra.mxu0 0
        %974 = vmatpush.bf16.msra.mxu0 0
        %975 = vmatpush.bf16.msra.mxu0 0
        %976 = vmatpush.bf16.msra.mxu0 0
        %977 = vmatpush.bf16.msra.mxu0 %v904
        %978 = vmatpush.bf16.msra.mxu0 %v900
        %979 = vmatmul.bf16.gmra.mxu0 %v948
        %v980 = vpop.f32.mrf.mxu0
        %v981 = vadd.f32 %v963, %v980
        %v982 = vpop.f32.mrf.mxu0
        %v983 = vadd.f32 %v965, %v982
        %984 = vmatmul.bf16.gmra.mxu0 %v951
        %v985 = vpop.f32.mrf.mxu0
        %v986 = vadd.f32 %v968, %v985
        %v987 = vpop.f32.mrf.mxu0
        %988 = vdwg.mxu0
        %989 = vmatpush.bf16.msra.mxu0 %v897
        %990 = vmatpush.bf16.msra.mxu0 %v893
        %991 = vmatpush.bf16.msra.mxu0 %v889
        %992 = vmatpush.bf16.msra.mxu0 %v885
        %993 = vmatpush.bf16.msra.mxu0 %v881
        %994 = vmatpush.bf16.msra.mxu0 %v877
        %995 = vmatpush.bf16.msra.mxu0 %v873
        %996 = vmatpush.bf16.msra.mxu0 %v869
        %997 = vmatmul.bf16.gmra.mxu0 %v358
        %v998 = vpop.f32.mrf.mxu0
        %v999 = vadd.f32 %v668, %v998
        %v1000 = vpop.f32.mrf.mxu0
        %v1001 = vadd.f32 %v670, %v1000
        %1002 = vmatmul.bf16.gmra.mxu0 %v360
        %v1003 = vpop.f32.mrf.mxu0
        %v1004 = vadd.f32 %v673, %v1003
        %v1005 = vpop.f32.mrf.mxu0
        %1006 = vdwg.mxu0
        %1007 = vmatpush.bf16.msra.mxu0 0
        %1008 = vmatpush.bf16.msra.mxu0 0
        %1009 = vmatpush.bf16.msra.mxu0 0
        %1010 = vmatpush.bf16.msra.mxu0 0
        %1011 = vmatpush.bf16.msra.mxu0 0
        %1012 = vmatpush.bf16.msra.mxu0 0
        %1013 = vmatpush.bf16.msra.mxu0 %v905
        %1014 = vmatpush.bf16.msra.mxu0 %v901
        %1015 = vmatmul.bf16.gmra.mxu0 %v948
        %v1016 = vpop.f32.mrf.mxu0
        %v1017 = vadd.f32 %v999, %v1016
        %v1018 = vpop.f32.mrf.mxu0
        %v1019 = vadd.f32 %v1001, %v1018
        %1020 = vmatmul.bf16.gmra.mxu0 %v951
        %v1021 = vpop.f32.mrf.mxu0
        %v1022 = vadd.f32 %v1004, %v1021
        %v1023 = vpop.f32.mrf.mxu0
        %1024 = vdwg.mxu0
        %1025 = vmatpush.bf16.msra.mxu0 %v898
        %1026 = vmatpush.bf16.msra.mxu0 %v894
        %1027 = vmatpush.bf16.msra.mxu0 %v890
        %1028 = vmatpush.bf16.msra.mxu0 %v886
        %1029 = vmatpush.bf16.msra.mxu0 %v882
        %1030 = vmatpush.bf16.msra.mxu0 %v878
        %1031 = vmatpush.bf16.msra.mxu0 %v874
        %1032 = vmatpush.bf16.msra.mxu0 %v870
        %1033 = vmatmul.bf16.gmra.mxu0 %v358
        %v1034 = vpop.f32.mrf.mxu0
        %v1035 = vadd.f32 %v704, %v1034
        %v1036 = vpop.f32.mrf.mxu0
        %v1037 = vadd.f32 %v706, %v1036
        %1038 = vmatmul.bf16.gmra.mxu0 %v360
        %v1039 = vpop.f32.mrf.mxu0
        %v1040 = vadd.f32 %v709, %v1039
        %v1041 = vpop.f32.mrf.mxu0
        %1042 = vdwg.mxu0
        %1043 = vmatpush.bf16.msra.mxu0 0
        %1044 = vmatpush.bf16.msra.mxu0 0
        %1045 = vmatpush.bf16.msra.mxu0 0
        %1046 = vmatpush.bf16.msra.mxu0 0
        %1047 = vmatpush.bf16.msra.mxu0 0
        %1048 = vmatpush.bf16.msra.mxu0 0
        %1049 = vmatpush.bf16.msra.mxu0 %v906
        %1050 = vmatpush.bf16.msra.mxu0 %v902
        %1051 = vmatmul.bf16.gmra.mxu0 %v948
        %v1052 = vpop.f32.mrf.mxu0
        %v1053 = vadd.f32 %v1035, %v1052
        %v1054 = vpop.f32.mrf.mxu0
        %v1055 = vadd.f32 %v1037, %v1054
        %1056 = vmatmul.bf16.gmra.mxu0 %v951
        %v1057 = vpop.f32.mrf.mxu0
        %v1058 = vadd.f32 %v1040, %v1057
        %v1059 = vpop.f32.mrf.mxu0
        %1060 = vdwg.mxu0
        %1061 = vmatpush.bf16.msra.mxu0 %v899
        %1062 = vmatpush.bf16.msra.mxu0 %v895
        %1063 = vmatpush.bf16.msra.mxu0 %v891
        %1064 = vmatpush.bf16.msra.mxu0 %v887
        %1065 = vmatpush.bf16.msra.mxu0 %v883
        %1066 = vmatpush.bf16.msra.mxu0 %v879
        %1067 = vmatpush.bf16.msra.mxu0 %v875
        %1068 = vmatpush.bf16.msra.mxu0 %v871
        %1069 = vmatmul.bf16.gmra.mxu0 %v358
        %v1070 = vpop.f32.mrf.mxu0
        %v1071 = vadd.f32 %v740, %v1070
        %v1072 = vpop.f32.mrf.mxu0
        %v1073 = vadd.f32 %v742, %v1072
        %1074 = vmatmul.bf16.gmra.mxu0 %v360
        %v1075 = vpop.f32.mrf.mxu0
        %v1076 = vadd.f32 %v745, %v1075
        %v1077 = vpop.f32.mrf.mxu0
        %1078 = vdwg.mxu0
        %1079 = vmatpush.bf16.msra.mxu0 0
        %1080 = vmatpush.bf16.msra.mxu0 0
        %1081 = vmatpush.bf16.msra.mxu0 0
        %1082 = vmatpush.bf16.msra.mxu0 0
        %1083 = vmatpush.bf16.msra.mxu0 0
        %1084 = vmatpush.bf16.msra.mxu0 0
        %1085 = vmatpush.bf16.msra.mxu0 %v907
        %1086 = vmatpush.bf16.msra.mxu0 %v903
        %1087 = vmatmul.bf16.gmra.mxu0 %v948
        %v1088 = vpop.f32.mrf.mxu0
        %v1089 = vadd.f32 %v1071, %v1088
        %v1090 = vpop.f32.mrf.mxu0
        %v1091 = vadd.f32 %v1073, %v1090
        %1092 = vmatmul.bf16.gmra.mxu0 %v951
        %v1093 = vpop.f32.mrf.mxu0
        %v1094 = vadd.f32 %v1076, %v1093
        %v1095 = vpop.f32.mrf.mxu0
        %1096 = vdwg.mxu0
        %vm1101 = vcmask 1046528
        %v1102 = vrot.slane %v358, 1
        %v1103 = vrot.slane %v362, 1
        %v1104 = vsel %vm1101, %v1102, %v1103
        %v1105 = vrot.slane %v359, 1
        %v1106 = vrot.slane %v363, 1
        %v1107 = vsel %vm1101, %v1105, %v1106
        %v1150 = vunpack.c.l.b16 %v318
        %v1151 = vunpack.c.h.b16 %v318
        %v1152 = vunpack.c.l.b16 %v319
        %v1153 = vunpack.c.h.b16 %v319
        %v1154 = vunpack.c.l.b16 %v320
        %v1155 = vunpack.c.h.b16 %v320
        %v1156 = vunpack.c.l.b16 %v321
        %v1157 = vunpack.c.h.b16 %v321
        %v1158 = vunpack.c.l.b16 %v322
        %v1159 = vunpack.c.h.b16 %v322
        %v1160 = vunpack.c.l.b16 %v323
        %v1161 = vunpack.c.h.b16 %v323
        %v1162 = vunpack.c.l.b16 %v324
        %v1163 = vunpack.c.h.b16 %v324
        %v1164 = vunpack.c.l.b16 %v325
        %v1165 = vunpack.c.h.b16 %v325
        %v1166 = vunpack.c.l.b16 %v326
        %v1167 = vunpack.c.h.b16 %v326
        %v1168 = vunpack.c.l.b16 %v327
        %v1169 = vunpack.c.h.b16 %v327
        %v1170 = vunpack.c.l.b16 %v328
        %v1171 = vunpack.c.h.b16 %v328
        %v1172 = vunpack.c.l.b16 %v329
        %v1173 = vunpack.c.h.b16 %v329
        %v1174 = vunpack.c.l.b16 %v330
        %v1175 = vunpack.c.h.b16 %v330
        %v1176 = vunpack.c.l.b16 %v331
        %v1177 = vunpack.c.h.b16 %v331
        %v1178 = vunpack.c.l.b16 %v332
        %v1179 = vunpack.c.h.b16 %v332
        %v1180 = vunpack.c.l.b16 %v333
        %v1181 = vunpack.c.h.b16 %v333
        %v1182 = vunpack.c.l.b16 %v334
        %v1183 = vunpack.c.h.b16 %v334
        %v1184 = vunpack.c.l.b16 %v335
        %v1185 = vunpack.c.h.b16 %v335
        %v1186 = vunpack.c.l.b16 %v336
        %v1187 = vunpack.c.h.b16 %v336
        %v1188 = vunpack.c.l.b16 %v337
        %v1189 = vunpack.c.h.b16 %v337
        %v1190 = vunpack.c.l.b16 %v338
        %v1191 = vunpack.c.h.b16 %v338
        %v1192 = vunpack.c.l.b16 %v339
        %v1193 = vunpack.c.h.b16 %v339
        %v1194 = vunpack.c.l.b16 %v340
        %v1195 = vunpack.c.h.b16 %v340
        %v1196 = vunpack.c.l.b16 %v341
        %v1197 = vunpack.c.h.b16 %v341
        %v1198 = vunpack.c.l.b16 %v342
        %v1199 = vunpack.c.h.b16 %v342
        %v1200 = vunpack.c.l.b16 %v343
        %v1201 = vunpack.c.h.b16 %v343
        %v1202 = vunpack.c.l.b16 %v344
        %v1203 = vunpack.c.h.b16 %v344
        %v1204 = vunpack.c.l.b16 %v345
        %v1205 = vunpack.c.h.b16 %v345
        %v1206 = vunpack.c.l.b16 %v346
        %v1207 = vunpack.c.h.b16 %v346
        %v1208 = vunpack.c.l.b16 %v347
        %v1209 = vunpack.c.h.b16 %v347
        %v1210 = vunpack.c.l.b16 %v348
        %v1211 = vunpack.c.h.b16 %v348
        %v1212 = vunpack.c.l.b16 %v349
        %v1213 = vunpack.c.h.b16 %v349
        %v1214 = vunpack.c.l.b16 %v350
        %v1215 = vunpack.c.h.b16 %v350
        %v1216 = vunpack.c.l.b16 %v351
        %v1217 = vunpack.c.h.b16 %v351
        %v1218 = vunpack.c.l.b16 %v352
        %v1219 = vunpack.c.h.b16 %v352
        %v1220 = vunpack.c.l.b16 %v353
        %v1221 = vunpack.c.h.b16 %v353
        %v1222 = vunpack.c.l.b16 %v354
        %v1223 = vunpack.c.h.b16 %v354
        %v1224 = vunpack.c.l.b16 %v355
        %v1225 = vunpack.c.h.b16 %v355
        %v1226 = vunpack.c.l.b16 %v356
        %v1227 = vunpack.c.h.b16 %v356
        %v1228 = vunpack.c.l.b16 %v357
        %v1229 = vunpack.c.h.b16 %v357
        %v1230 = vpack.c.b16 %v1154, %v1150
        %v1231 = vpack.c.b16 %v1155, %v1151
        %v1232 = vpack.c.b16 %v1156, %v1152
        %v1233 = vpack.c.b16 %v1157, %v1153
        %v1234 = vpack.c.b16 %v1162, %v1158
        %v1235 = vpack.c.b16 %v1163, %v1159
        %v1236 = vpack.c.b16 %v1164, %v1160
        %v1237 = vpack.c.b16 %v1165, %v1161
        %v1238 = vpack.c.b16 %v1170, %v1166
        %v1239 = vpack.c.b16 %v1171, %v1167
        %v1240 = vpack.c.b16 %v1172, %v1168
        %v1241 = vpack.c.b16 %v1173, %v1169
        %v1242 = vpack.c.b16 %v1178, %v1174
        %v1243 = vpack.c.b16 %v1179, %v1175
        %v1244 = vpack.c.b16 %v1180, %v1176
        %v1245 = vpack.c.b16 %v1181, %v1177
        %v1246 = vpack.c.b16 %v1186, %v1182
        %v1247 = vpack.c.b16 %v1187, %v1183
        %v1248 = vpack.c.b16 %v1188, %v1184
        %v1249 = vpack.c.b16 %v1189, %v1185
        %v1250 = vpack.c.b16 %v1194, %v1190
        %v1251 = vpack.c.b16 %v1195, %v1191
        %v1252 = vpack.c.b16 %v1196, %v1192
        %v1253 = vpack.c.b16 %v1197, %v1193
        %v1254 = vpack.c.b16 %v1202, %v1198
        %v1255 = vpack.c.b16 %v1203, %v1199
        %v1256 = vpack.c.b16 %v1204, %v1200
        %v1257 = vpack.c.b16 %v1205, %v1201
        %v1258 = vpack.c.b16 %v1210, %v1206
        %v1259 = vpack.c.b16 %v1211, %v1207
        %v1260 = vpack.c.b16 %v1212, %v1208
        %v1261 = vpack.c.b16 %v1213, %v1209
        %v1262 = vpack.c.b16 %v1218, %v1214
        %v1263 = vpack.c.b16 %v1219, %v1215
        %v1264 = vpack.c.b16 %v1220, %v1216
        %v1265 = vpack.c.b16 %v1221, %v1217
        %v1266 = vpack.c.b16 %v1226, %v1222
        %v1267 = vpack.c.b16 %v1227, %v1223
        %v1268 = vpack.c.b16 %v1228, %v1224
        %v1269 = vpack.c.b16 %v1229, %v1225
        %v1311 = vsel %vm597, %v1107, 0
        %v1314 = vsel %vm597, %v1106, 0
        %1316 = vmatpush.bf16.msra.mxu0 %v1258
        %1317 = vmatpush.bf16.msra.mxu0 %v1254
        %1318 = vmatpush.bf16.msra.mxu0 %v1250
        %1319 = vmatpush.bf16.msra.mxu0 %v1246
        %1320 = vmatpush.bf16.msra.mxu0 %v1242
        %1321 = vmatpush.bf16.msra.mxu0 %v1238
        %1322 = vmatpush.bf16.msra.mxu0 %v1234
        %1323 = vmatpush.bf16.msra.mxu0 %v1230
        %1324 = vmatmul.bf16.gmra.mxu0 %v1104
        %v1325 = vpop.f32.mrf.mxu0
        %v1326 = vadd.f32 0.0, %v1325
        %v1327 = vpop.f32.mrf.mxu0
        %v1328 = vadd.f32 0.0, %v1327
        %1329 = vmatmul.bf16.gmra.mxu0 %v1103
        %v1330 = vpop.f32.mrf.mxu0
        %v1331 = vadd.f32 0.0, %v1330
        %v1332 = vpop.f32.mrf.mxu0
        %1333 = vdwg.mxu0
        %1334 = vmatpush.bf16.msra.mxu0 0
        %1335 = vmatpush.bf16.msra.mxu0 0
        %1336 = vmatpush.bf16.msra.mxu0 0
        %1337 = vmatpush.bf16.msra.mxu0 0
        %1338 = vmatpush.bf16.msra.mxu0 0
        %1339 = vmatpush.bf16.msra.mxu0 0
        %1340 = vmatpush.bf16.msra.mxu0 %v1266
        %1341 = vmatpush.bf16.msra.mxu0 %v1262
        %1342 = vmatmul.bf16.gmra.mxu0 %v1311
        %v1343 = vpop.f32.mrf.mxu0
        %v1344 = vadd.f32 %v1326, %v1343
        %v1345 = vpop.f32.mrf.mxu0
        %v1346 = vadd.f32 %v1328, %v1345
        %1347 = vmatmul.bf16.gmra.mxu0 %v1314
        %v1348 = vpop.f32.mrf.mxu0
        %v1349 = vadd.f32 %v1331, %v1348
        %v1350 = vpop.f32.mrf.mxu0
        %1351 = vdwg.mxu0
        %1352 = vmatpush.bf16.msra.mxu0 %v1259
        %1353 = vmatpush.bf16.msra.mxu0 %v1255
        %1354 = vmatpush.bf16.msra.mxu0 %v1251
        %1355 = vmatpush.bf16.msra.mxu0 %v1247
        %1356 = vmatpush.bf16.msra.mxu0 %v1243
        %1357 = vmatpush.bf16.msra.mxu0 %v1239
        %1358 = vmatpush.bf16.msra.mxu0 %v1235
        %1359 = vmatpush.bf16.msra.mxu0 %v1231
        %1360 = vmatmul.bf16.gmra.mxu0 %v1104
        %v1361 = vpop.f32.mrf.mxu0
        %v1362 = vadd.f32 0.0, %v1361
        %v1363 = vpop.f32.mrf.mxu0
        %v1364 = vadd.f32 0.0, %v1363
        %1365 = vmatmul.bf16.gmra.mxu0 %v1103
        %v1366 = vpop.f32.mrf.mxu0
        %v1367 = vadd.f32 0.0, %v1366
        %v1368 = vpop.f32.mrf.mxu0
        %1369 = vdwg.mxu0
        %1370 = vmatpush.bf16.msra.mxu0 0
        %1371 = vmatpush.bf16.msra.mxu0 0
        %1372 = vmatpush.bf16.msra.mxu0 0
        %1373 = vmatpush.bf16.msra.mxu0 0
        %1374 = vmatpush.bf16.msra.mxu0 0
        %1375 = vmatpush.bf16.msra.mxu0 0
        %1376 = vmatpush.bf16.msra.mxu0 %v1267
        %1377 = vmatpush.bf16.msra.mxu0 %v1263
        %1378 = vmatmul.bf16.gmra.mxu0 %v1311
        %v1379 = vpop.f32.mrf.mxu0
        %v1380 = vadd.f32 %v1362, %v1379
        %v1381 = vpop.f32.mrf.mxu0
        %v1382 = vadd.f32 %v1364, %v1381
        %1383 = vmatmul.bf16.gmra.mxu0 %v1314
        %v1384 = vpop.f32.mrf.mxu0
        %v1385 = vadd.f32 %v1367, %v1384
        %v1386 = vpop.f32.mrf.mxu0
        %1387 = vdwg.mxu0
        %1388 = vmatpush.bf16.msra.mxu0 %v1260
        %1389 = vmatpush.bf16.msra.mxu0 %v1256
        %1390 = vmatpush.bf16.msra.mxu0 %v1252
        %1391 = vmatpush.bf16.msra.mxu0 %v1248
        %1392 = vmatpush.bf16.msra.mxu0 %v1244
        %1393 = vmatpush.bf16.msra.mxu0 %v1240
        %1394 = vmatpush.bf16.msra.mxu0 %v1236
        %1395 = vmatpush.bf16.msra.mxu0 %v1232
        %1396 = vmatmul.bf16.gmra.mxu0 %v1104
        %v1397 = vpop.f32.mrf.mxu0
        %v1398 = vadd.f32 0.0, %v1397
        %v1399 = vpop.f32.mrf.mxu0
        %v1400 = vadd.f32 0.0, %v1399
        %1401 = vmatmul.bf16.gmra.mxu0 %v1103
        %v1402 = vpop.f32.mrf.mxu0
        %v1403 = vadd.f32 0.0, %v1402
        %v1404 = vpop.f32.mrf.mxu0
        %1405 = vdwg.mxu0
        %1406 = vmatpush.bf16.msra.mxu0 0
        %1407 = vmatpush.bf16.msra.mxu0 0
        %1408 = vmatpush.bf16.msra.mxu0 0
        %1409 = vmatpush.bf16.msra.mxu0 0
        %1410 = vmatpush.bf16.msra.mxu0 0
        %1411 = vmatpush.bf16.msra.mxu0 0
        %1412 = vmatpush.bf16.msra.mxu0 %v1268
        %1413 = vmatpush.bf16.msra.mxu0 %v1264
        %1414 = vmatmul.bf16.gmra.mxu0 %v1311
        %v1415 = vpop.f32.mrf.mxu0
        %v1416 = vadd.f32 %v1398, %v1415
        %v1417 = vpop.f32.mrf.mxu0
        %v1418 = vadd.f32 %v1400, %v1417
        %1419 = vmatmul.bf16.gmra.mxu0 %v1314
        %v1420 = vpop.f32.mrf.mxu0
        %v1421 = vadd.f32 %v1403, %v1420
        %v1422 = vpop.f32.mrf.mxu0
        %1423 = vdwg.mxu0
        %1424 = vmatpush.bf16.msra.mxu0 %v1261
        %1425 = vmatpush.bf16.msra.mxu0 %v1257
        %1426 = vmatpush.bf16.msra.mxu0 %v1253
        %1427 = vmatpush.bf16.msra.mxu0 %v1249
        %1428 = vmatpush.bf16.msra.mxu0 %v1245
        %1429 = vmatpush.bf16.msra.mxu0 %v1241
        %1430 = vmatpush.bf16.msra.mxu0 %v1237
        %1431 = vmatpush.bf16.msra.mxu0 %v1233
        %1432 = vmatmul.bf16.gmra.mxu0 %v1104
        %v1433 = vpop.f32.mrf.mxu0
        %v1434 = vadd.f32 0.0, %v1433
        %v1435 = vpop.f32.mrf.mxu0
        %v1436 = vadd.f32 0.0, %v1435
        %1437 = vmatmul.bf16.gmra.mxu0 %v1103
        %v1438 = vpop.f32.mrf.mxu0
        %v1439 = vadd.f32 0.0, %v1438
        %v1440 = vpop.f32.mrf.mxu0
        %1441 = vdwg.mxu0
        %1442 = vmatpush.bf16.msra.mxu0 0
        %1443 = vmatpush.bf16.msra.mxu0 0
        %1444 = vmatpush.bf16.msra.mxu0 0
        %1445 = vmatpush.bf16.msra.mxu0 0
        %1446 = vmatpush.bf16.msra.mxu0 0
        %1447 = vmatpush.bf16.msra.mxu0 0
        %1448 = vmatpush.bf16.msra.mxu0 %v1269
        %1449 = vmatpush.bf16.msra.mxu0 %v1265
        %1450 = vmatmul.bf16.gmra.mxu0 %v1311
        %v1451 = vpop.f32.mrf.mxu0
        %v1452 = vadd.f32 %v1434, %v1451
        %v1453 = vpop.f32.mrf.mxu0
        %v1454 = vadd.f32 %v1436, %v1453
        %1455 = vmatmul.bf16.gmra.mxu0 %v1314
        %v1456 = vpop.f32.mrf.mxu0
        %v1457 = vadd.f32 %v1439, %v1456
        %v1458 = vpop.f32.mrf.mxu0
        %1459 = vdwg.mxu0
        %v1460 = vadd.f32 %v981, %v1344
        %v1461 = vadd.f32 %v1017, %v1380
        %v1462 = vadd.f32 %v1053, %v1416
        %v1463 = vadd.f32 %v1089, %v1452
        %v1464 = vadd.f32 %v983, %v1346
        %v1465 = vadd.f32 %v1019, %v1382
        %v1466 = vadd.f32 %v1055, %v1418
        %v1467 = vadd.f32 %v1091, %v1454
        %v1468 = vadd.f32 %v986, %v1349
        %v1469 = vadd.f32 %v1022, %v1385
        %v1470 = vadd.f32 %v1058, %v1421
        %v1471 = vadd.f32 %v1094, %v1457
        %v1472 = vmul.f32 %v1460, %v1460
        %v1473 = vmul.f32 %v1461, %v1461
        %v1474 = vmul.f32 %v1464, %v1464
        %v1475 = vmul.f32 %v1465, %v1465
        %v1476 = vmul.f32 %v1468, %v1468
        %v1477 = vmul.f32 %v1469, %v1469
        %v1478 = vmul.f32 %v1462, %v1462
        %v1479 = vmul.f32 %v1463, %v1463
        %v1480 = vmul.f32 %v1466, %v1466
        %v1481 = vmul.f32 %v1467, %v1467
        %v1482 = vmul.f32 %v1470, %v1470
        %v1483 = vmul.f32 %v1471, %v1471
        %v1484 = vadd.f32 %v1472, %v1478
        %v1485 = vadd.f32 %v1473, %v1479
        %v1486 = vadd.f32 %v1474, %v1480
        %v1487 = vadd.f32 %v1475, %v1481
        %v1488 = vadd.f32 %v1476, %v1482
        %v1489 = vadd.f32 %v1477, %v1483
        %v1490 = vpack.c.bf16 %v1486, %v1484
        %v1491 = vpack.c.bf16 %v1487, %v1485
        %v1492 = vpack.c.bf16 %v1488, %v1488
        %v1493 = vpack.c.bf16 %v1489, %v1489
        %v1494 = vld [vmem:[#allocation7] sm:$0xf]
        %v1495 = vld [vmem:[#allocation7 + $0x4] sm:$0xf]
        %v1496 = vld [vmem:[#allocation7 + $0x8] sm:$0xf]
        %v1497 = vld [vmem:[#allocation7 + $0xc] sm:$0xf]
        %v1498 = vld [vmem:[#allocation7 + $0x10] sm:$0xf]
        %v1499 = vld [vmem:[#allocation7 + $0x14] sm:$0xf]
        %v1500 = vld [vmem:[#allocation7 + $0x18] sm:$0xf]
        %v1501 = vld [vmem:[#allocation7 + $0x1c] sm:$0xf]
        %v1502 = vld [vmem:[#allocation7 + $0x20] sm:$0xf]
        %v1503 = vld [vmem:[#allocation7 + $0x24] sm:$0xf]
        %v1504 = vld [vmem:[#allocation7 + $0x28] sm:$0xf]
        %v1505 = vld [vmem:[#allocation7 + $0x2c] sm:$0xf]
        %v1506 = vld [vmem:[#allocation7 + $0x30] sm:$0xf]
        %v1507 = vld [vmem:[#allocation7 + $0x34] sm:$0xf]
        %v1508 = vld [vmem:[#allocation7 + $0x38] sm:$0xf]
        %v1509 = vld [vmem:[#allocation7 + $0x3c] sm:$0xf]
        %v1510 = vld [vmem:[#allocation7 + $0x40] sm:$0xf]
        %v1511 = vld [vmem:[#allocation7 + $0x44] sm:$0xf]
        %v1512 = vld [vmem:[#allocation7 + $0x48] sm:$0xf]
        %v1513 = vld [vmem:[#allocation7 + $0x4c] sm:$0xf]
        %v1514 = vld [vmem:[#allocation7 + $0x50] sm:$0xf]
        %v1515 = vld [vmem:[#allocation7 + $0x54] sm:$0xf]
        %v1516 = vld [vmem:[#allocation7 + $0x58] sm:$0xf]
        %v1517 = vld [vmem:[#allocation7 + $0x5c] sm:$0xf]
        %v1518 = vld [vmem:[#allocation7 + $0x60] sm:$0xf]
        %v1519 = vld [vmem:[#allocation7 + $0x64] sm:$0xf]
        %v1520 = vld [vmem:[#allocation7 + $0x68] sm:$0xf]
        %v1521 = vld [vmem:[#allocation7 + $0x6c] sm:$0xf]
        %v1522 = vld [vmem:[#allocation7 + $0x70] sm:$0xf]
        %v1523 = vld [vmem:[#allocation7 + $0x74] sm:$0xf]
        %v1524 = vld [vmem:[#allocation7 + $0x78] sm:$0xf]
        %v1525 = vld [vmem:[#allocation7 + $0x7c] sm:$0xf]
        %v1558 = vunpack.c.l.b16 %v1494
        %v1559 = vunpack.c.l.b16 %v1495
        %v1560 = vunpack.c.l.b16 %v1496
        %v1561 = vunpack.c.l.b16 %v1497
        %v1562 = vunpack.c.l.b16 %v1498
        %v1563 = vunpack.c.l.b16 %v1499
        %v1564 = vunpack.c.l.b16 %v1500
        %v1565 = vunpack.c.l.b16 %v1501
        %v1566 = vunpack.c.l.b16 %v1502
        %v1567 = vunpack.c.l.b16 %v1503
        %v1568 = vunpack.c.l.b16 %v1504
        %v1569 = vunpack.c.l.b16 %v1505
        %v1570 = vunpack.c.l.b16 %v1506
        %v1571 = vunpack.c.l.b16 %v1507
        %v1572 = vunpack.c.l.b16 %v1508
        %v1573 = vunpack.c.l.b16 %v1509
        %v1574 = vunpack.c.l.b16 %v1510
        %v1575 = vunpack.c.l.b16 %v1511
        %v1576 = vunpack.c.l.b16 %v1512
        %v1577 = vunpack.c.l.b16 %v1513
        %v1578 = vunpack.c.l.b16 %v1514
        %v1579 = vunpack.c.l.b16 %v1515
        %v1580 = vunpack.c.l.b16 %v1516
        %v1581 = vunpack.c.l.b16 %v1517
        %v1582 = vunpack.c.l.b16 %v1518
        %v1583 = vunpack.c.l.b16 %v1519
        %v1584 = vunpack.c.l.b16 %v1520
        %v1585 = vunpack.c.l.b16 %v1521
        %v1586 = vunpack.c.l.b16 %v1522
        %v1587 = vunpack.c.l.b16 %v1523
        %v1588 = vunpack.c.l.b16 %v1524
        %v1589 = vunpack.c.l.b16 %v1525
        %v1590 = vpack.c.b16 %v1559, %v1558
        %v1591 = vpack.c.b16 %v1561, %v1560
        %v1592 = vpack.c.b16 %v1563, %v1562
        %v1593 = vpack.c.b16 %v1565, %v1564
        %v1594 = vpack.c.b16 %v1567, %v1566
        %v1595 = vpack.c.b16 %v1569, %v1568
        %v1596 = vpack.c.b16 %v1571, %v1570
        %v1597 = vpack.c.b16 %v1573, %v1572
        %v1598 = vpack.c.b16 %v1575, %v1574
        %v1599 = vpack.c.b16 %v1577, %v1576
        %v1600 = vpack.c.b16 %v1579, %v1578
        %v1601 = vpack.c.b16 %v1581, %v1580
        %v1602 = vpack.c.b16 %v1583, %v1582
        %v1603 = vpack.c.b16 %v1585, %v1584
        %v1604 = vpack.c.b16 %v1587, %v1586
        %v1605 = vpack.c.b16 %v1589, %v1588
        %1622 = vmatpush.bf16.msra.mxu0 %v1597
        %1623 = vmatpush.bf16.msra.mxu0 %v1596
        %1624 = vmatpush.bf16.msra.mxu0 %v1595
        %1625 = vmatpush.bf16.msra.mxu0 %v1594
        %1626 = vmatpush.bf16.msra.mxu0 %v1593
        %1627 = vmatpush.bf16.msra.mxu0 %v1592
        %1628 = vmatpush.bf16.msra.mxu0 %v1591
        %1629 = vmatpush.bf16.msra.mxu0 %v1590
        %1630 = vmatmul.bf16.gmra.mxu0 %v1490
        %v1631 = vpop.f32.mrf.mxu0
        %v1632 = vadd.f32 0.0, %v1631
        %v1633 = vpop.f32.mrf.mxu0
        %v1634 = vadd.f32 0.0, %v1633
        %1635 = vmatmul.bf16.gmra.mxu0 %v1492
        %v1636 = vpop.f32.mrf.mxu0
        %v1637 = vadd.f32 0.0, %v1636
        %v1638 = vpop.f32.mrf.mxu0
        %1639 = vdwg.mxu0
        %1640 = vmatpush.bf16.msra.mxu0 %v1605
        %1641 = vmatpush.bf16.msra.mxu0 %v1604
        %1642 = vmatpush.bf16.msra.mxu0 %v1603
        %1643 = vmatpush.bf16.msra.mxu0 %v1602
        %1644 = vmatpush.bf16.msra.mxu0 %v1601
        %1645 = vmatpush.bf16.msra.mxu0 %v1600
        %1646 = vmatpush.bf16.msra.mxu0 %v1599
        %1647 = vmatpush.bf16.msra.mxu0 %v1598
        %1648 = vmatmul.bf16.gmra.mxu0 %v1491
        %v1649 = vpop.f32.mrf.mxu0
        %v1650 = vadd.f32 %v1632, %v1649
        %v1651 = vpop.f32.mrf.mxu0
        %v1652 = vadd.f32 %v1634, %v1651
        %1653 = vmatmul.bf16.gmra.mxu0 %v1493
        %v1654 = vpop.f32.mrf.mxu0
        %v1655 = vadd.f32 %v1637, %v1654
        %v1656 = vpop.f32.mrf.mxu0
        %1657 = vdwg.mxu0
        %v1658 = vmax.f32 %v1650, 1e-10
        %v1659 = vmax.f32 %v1652, 1e-10
        %v1660 = vmax.f32 %v1655, 1e-10
        %v1661 = vlog2.pop %v1658
        %v1662 = vmul.f32 %v1661, 0.6931472
        %v1663 = vlog2.pop %v1659
        %v1664 = vmul.f32 %v1663, 0.6931472
        %v1665 = vlog2.pop %v1660
        %v1666 = vmul.f32 %v1665, 0.6931472
        %v1667 = vmul.f32 %v1662, 4.3429446
        %v1668 = vmul.f32 %v1664, 4.3429446
        %v1669 = vmul.f32 %v1666, 4.3429446
        %1670 = vst [vmem:[%s223] sm:$0xff] %v1667
        %1671 = vst [vmem:[%s223 + $0x8] sm:$0xff] %v1668
        %1672 = vst [vmem:[%s223 + $0x10] sm:$0xff] %v1669
        %s1673 = sand.u32 %s97, 1
        %s1674 = scalar_lea.sflag [#allocation4], %s1673
        %s1675 = sand.u32 %s97, 1
        %s1676 = smul.addr %s1675, 24
        %s1677 = scalar_lea.vmem [#allocation8], %s1676
        // Predicated region
        $region45: #{tpu_custom_call.1} parent=31 // pred_check
          %p1678 = pneg %p107
        $region46: #{tpu_custom_call.1} parent=31 // pred_check_branch
          %1680 = sbr.rel (%p1678) target = $region48
        $region47: #{tpu_custom_call.1} parent=31 // pred_region
          %s1681 = smul.u32 3, %s21
          %1683 = vsyncadd %s1674, 0
          %s1684 = smul.addr %s1681, 8
          %s1685 = scalar_lea.hbm %s3, %s1684
          %s1686 = sshll.u32 %s1677, 4
          %s1687 = int_to_ptr.vmem [resolvable:$true] %s1686
          %s1688 = sshll.u32 %s1685, 4
          %s1689 = int_to_ptr.hbm [resolvable:$true] %s1688
          %1694 = dma.vmem_to_hbm [thread:$0]  %s1687, 384, %s1689, %s1674, 128, 128, 8
        $region48: #{tpu_custom_call.1} parent=31 // pred_fallthru
          _
      $region32: #{tpu_custom_call.1} parent=5 // pred_fallthru
        _
      %p1695 = scmp.le.s32.totalorder 2, %s16
      // Predicated region
      $region49: #{tpu_custom_call.1} parent=5 // pred_check
        %p1696 = pneg %p1695
      $region50: #{tpu_custom_call.1} parent=5 // pred_check_branch
        %1698 = sbr.rel (%p1696) target = $region52
      $region51: #{tpu_custom_call.1} parent=5 // pred_region
        %s1699 = ssub.s32 %s16, 2
        // Predicated region
        $region53: #{tpu_custom_call.1} parent=51 // pred_check
          %p1700 = pneg %p113
        $region54: #{tpu_custom_call.1} parent=51 // pred_check_branch
          %1702 = sbr.rel (%p1700) target = $region56
        $region55: #{tpu_custom_call.1} parent=51 // pred_region
          %s1703 = sand.u32 %s98, 1
          %s1704 = scalar_lea.sflag [#allocation4], %s1703
          %s1705 = sand.u32 %s98, 1
          %s1706 = smul.addr %s1705, 24
          %s1707 = scalar_lea.vmem [#allocation8], %s1706
          %1709 = dma.done %s1704, 384
        $region56: #{tpu_custom_call.1} parent=51 // pred_fallthru
          _
      $region52: #{tpu_custom_call.1} parent=5 // pred_fallthru
        _
    $region6: #{tpu_custom_call.1} parent=1 // loop_footer
      %s20 = sadd.s32 1, %s16
    $region7: #{tpu_custom_call.1} parent=1 // loop_footer_branch
      %15 = sbr.rel target = $region3
    $region8: #{tpu_custom_call.1} parent=1 // loop_exit
      _
    %1710 = vsyncpa [#allocation3], 1
    %s1711 = scalar_lea.sflag [#allocation3], 1
    %1712 = vsyncpa %s1711, 1
    %1713 = vsyncpa [#allocation6], 1
    %1714 = vsyncpa [#allocation4], 1
    %s1715 = scalar_lea.sflag [#allocation4], 1
    %1716 = vsyncpa %s1715, 1

</llo_original>
